<compile_context>
chip_gen: v5e
topology: v5e:2x2
jax: 0.10.0
libtpu: 0.0.40
codegen_flags: <defaults>
</compile_context>

<pallas_src>
import jax
import jax.numpy as jnp
from jax import lax
from jax.experimental import pallas as pl
from jax.experimental.pallas import tpu as pltpu

# Operand dtype for the recurrent h @ W_hh matmuls (MXU operands only; the
# accumulation and all elementwise gate math stay f32, so this is v5e-safe).
# Set to jnp.float32 if a bit-exact f32 recurrence is required.
RECURRENT_MATMUL_DTYPE = jnp.bfloat16


def _apply_gates(gates, c, H):
    """LSTM nonlinearity with gate columns laid out as [i, f, o, g].

    sigmoid/tanh run over the FULL (B, 4H) vreg (EUP slot otherwise idle,
    extra lanes are free); the 32-lane gate blocks are sliced out only for the
    cheap VPU combine."""
    s = jax.nn.sigmoid(gates)          # (B, 4H) full-vreg EUP
    tg = jnp.tanh(gates)               # (B, 4H) full-vreg EUP
    i_g = s[:, 0 * H:1 * H]
    f_g = s[:, 1 * H:2 * H]
    o_g = s[:, 2 * H:3 * H]
    g_g = tg[:, 3 * H:4 * H]
    c_new = f_g * c + i_g * g_g
    h_new = o_g * jnp.tanh(c_new)
    return h_new, c_new


def seq2seq_kernel(tf_ref,                        # SMEM (T,) int32 teacher-forcing flags
                   src_flat_ref,                  # VMEM (S*B, E) time-major flattened src emb
                   tgt_flat_ref,                  # VMEM (T*B, E) time-major flattened tgt emb
                   dec_emb_tbl_ref,               # VMEM (V, E) decoder embedding table
                   wih_e_ref, whh_e_ref, b_e_ref,  # encoder LSTM ((E,4H) f32, (H,4H) bf16, (1,4H) f32)
                   wih_d_ref, whh_d_ref, b_d_ref,  # decoder LSTM ((E,4H) f32, (H,4H) bf16, (1,4H) f32)
                   wfc_ref, bfc_ref,              # decoder FC ((H,V),(1,V)) f32
                   out_ref,                       # VMEM (T, B, V) f32
                   hs_ref):                       # VMEM scratch ((T-1)*B, H) f32
    T, B, V = out_ref.shape
    S = src_flat_ref.shape[0] // B
    H = whh_e_ref.shape[0]
    f32 = jnp.float32
    mm_dt = whh_e_ref.dtype            # recurrent MXU operand dtype (bf16 by default)

    # ---------------- Encoder ----------------
    # Batched x-projection: one (S*B, E) @ (E, 4H) matmul off the recurrence.
    enc_pre = (jnp.dot(src_flat_ref[...], wih_e_ref[...],
                       preferred_element_type=f32)
               + b_e_ref[...])                                    # (S*B, 4H)

    whh_e = whh_e_ref[...]
    h = jnp.zeros((B, H), f32)
    c = jnp.zeros((B, H), f32)
    # TODO(synk): hold whh_e / whh_d / wfc resident in MXU staging registers via
    # pltpu.matmul_push_rhs / matmul_acc_lhs / matmul_pop instead of re-pushing
    # the same RHS every recurrent step (skipped here for lowering robustness).
    for t in range(S):                                            # fully unrolled (static t)
        gates = (enc_pre[t * B:(t + 1) * B, :]
                 + jnp.dot(h.astype(mm_dt), whh_e, preferred_element_type=f32))
        h, c = _apply_gates(gates, c, H)

    # ---------------- Decoder ----------------
    # x-projections hoisted off the recurrence:
    #  * teacher inputs:   (T*B, E) @ (E, 4H) once, bias folded in
    #  * greedy inputs:    (V, E)  @ (E, 4H) once; onehot rows sum to 1, so the
    #    folded bias is preserved by onehot @ dec_emb_proj.
    tgt_pre = (jnp.dot(tgt_flat_ref[...], wih_d_ref[...],
                       preferred_element_type=f32)
               + b_d_ref[...])                                    # (T*B, 4H)
    dec_emb_proj = (jnp.dot(dec_emb_tbl_ref[...], wih_d_ref[...],
                            preferred_element_type=f32)
                    + b_d_ref[...])                               # (V, 4H)

    whh_d = whh_d_ref[...]
    iota_v = lax.broadcasted_iota(jnp.int32, (B, V), 1)

    pre = tgt_pre[0:B, :]              # pre-gates of embedding(target[:, 0])
    for t in range(1, T):                                         # fully unrolled (static t)
        # Per-step critical path: one K=H matmul + VPU add + gate nonlinearity.
        gates = pre + jnp.dot(h.astype(mm_dt), whh_d, preferred_element_type=f32)
        h, c = _apply_gates(gates, c, H)
        hs_ref[(t - 1) * B:t * B, :] = h        # vst slot idle; bounds live range

        if t < T - 1:  # last step's "next input" is never consumed
            def _teacher(t=t):
                return tgt_pre[t * B:(t + 1) * B, :]              # (B, 4H)

            def _greedy(h=h):
                # f32 logits: numerically identical to the post-loop output FC,
                # so torch.argmax tie-breaking stays consistent with outputs[:, t].
                logits = (jnp.dot(h, wfc_ref[...], preferred_element_type=f32)
                          + bfc_ref[...])                         # (B, V)
                mx = jnp.max(logits, axis=1, keepdims=True)
                masked = jnp.where(logits == mx, iota_v, V)
                top1 = jnp.min(masked, axis=1, keepdims=True)     # first index among ties
                onehot = (iota_v == top1).astype(f32)             # (B, V)
                # Next-step pre-gates directly (bias folded into dec_emb_proj).
                return jnp.dot(onehot, dec_emb_proj, preferred_element_type=f32)

            # Skip the whole argmax / projected-gather block on teacher-forced
            # steps; both branches return f32 (B, 4H) pre-gates.
            pre = lax.cond(tf_ref[t] == 1, _teacher, _greedy)

    # ---------------- Output FC (off the recurrence) ----------------
    # One ((T-1)*B, H) @ (H, V) matmul; results written lane-dense (V = 128)
    # straight into the output slab (no concat temp).
    logits_all = (jnp.dot(hs_ref[...], wfc_ref[...], preferred_element_type=f32)
                  + bfc_ref[...])                                 # ((T-1)*B, V)
    out_ref[0] = jnp.zeros((B, V), f32)
    out_ref[1:, :, :] = logits_all.reshape(T - 1, B, V)


@jax.jit
def seq2seq_forward(source_tok, target_tok, tf_flags, params):
    """source_tok: (B, S) int32; target_tok: (B, T) int32; tf_flags: (T,) int32.

    Returns outputs of shape (B, T, V) float32 (row t=0 all zeros)."""
    (enc_emb, dec_emb,
     wih_e, whh_e, b_e,
     wih_d, whh_d, b_d,
     wfc, bfc) = params

    B, S = source_tok.shape
    T = target_tok.shape[1]
    V = wfc.shape[1]
    E = enc_emb.shape[1]
    H = whh_e.shape[0]
    mm_dt = RECURRENT_MATMUL_DTYPE

    # Glue: embedding gathers + batch-major -> time-major flatten (tiny XLA ops).
    src_flat = (jnp.transpose(enc_emb[source_tok], (1, 0, 2))
                .reshape(S * B, E).astype(jnp.float32))           # (S*B, E)
    tgt_flat = (jnp.transpose(dec_emb[target_tok], (1, 0, 2))
                .reshape(T * B, E).astype(jnp.float32))           # (T*B, E)

    vmem = pl.BlockSpec(memory_space=pltpu.MemorySpace.VMEM)
    smem = pl.BlockSpec(memory_space=pltpu.MemorySpace.SMEM)

    out_tm = pl.pallas_call(
        seq2seq_kernel,
        out_shape=jax.ShapeDtypeStruct((T, B, V), jnp.float32),
        in_specs=[smem,                      # tf flags
                  vmem, vmem,                # src_flat, tgt_flat
                  vmem,                      # decoder embedding table
                  vmem, vmem, vmem,          # encoder LSTM
                  vmem, vmem, vmem,          # decoder LSTM
                  vmem, vmem],               # fc
        out_specs=vmem,
        scratch_shapes=[pltpu.VMEM(((T - 1) * B, H), jnp.float32)],
    )(tf_flags.astype(jnp.int32),
      src_flat, tgt_flat, dec_emb.astype(jnp.float32),
      wih_e, whh_e.astype(mm_dt), b_e,
      wih_d, whh_d.astype(mm_dt), b_d,
      wfc, bfc)

    # Kernel writes one lane-dense time-major slab; this 32 KB transpose is
    # cheap XLA glue back to the module's batch-major convention.
    return jnp.transpose(out_tm, (1, 0, 2))                       # (B, T, V)


def make_params(key, src_vocab, tgt_vocab, emb_dim, hidden):
    ks = jax.random.split(key, 10)
    scale = 1.0 / jnp.sqrt(hidden)
    u = lambda k, shape: jax.random.uniform(k, shape, jnp.float32, -scale, scale)
    enc_emb = jax.random.normal(ks[0], (src_vocab, emb_dim), jnp.float32) * 0.1
    dec_emb = jax.random.normal(ks[1], (tgt_vocab, emb_dim), jnp.float32) * 0.1
    # LSTM weights stored pre-transposed for x @ W, gate columns laid out as
    # [i, f, o, g] (when porting a PyTorch checkpoint, permute the four H-column
    # blocks from [i, f, g, o] and transpose), and bias = b_ih + b_hh fused.
    wih_e = u(ks[2], (emb_dim, 4 * hidden))
    whh_e = u(ks[3], (hidden, 4 * hidden))
    b_e = u(ks[4], (1, 4 * hidden))
    wih_d = u(ks[5], (emb_dim, 4 * hidden))
    whh_d = u(ks[6], (hidden, 4 * hidden))
    b_d = u(ks[7], (1, 4 * hidden))
    wfc = u(ks[8], (hidden, tgt_vocab))
    bfc = u(ks[9], (1, tgt_vocab))
    return (enc_emb, dec_emb, wih_e, whh_e, b_e, wih_d, whh_d, b_d, wfc, bfc)


if __name__ == "__main__":
    B, S, T = 8, 8, 8          # batch, source len, target len
    E, H = 32, 32              # embedding dim, hidden dim
    SRC_V, TGT_V = 128, 128    # vocab sizes (decoder.fc.out_features = TGT_V)

    key = jax.random.PRNGKey(0)
    k_par, k_src, k_tgt, k_tf = jax.random.split(key, 4)

    params = make_params(k_par, SRC_V, TGT_V, E, H)
    source = jax.random.randint(k_src, (B, S), 0, SRC_V, jnp.int32)
    target = jax.random.randint(k_tgt, (B, T), 0, TGT_V, jnp.int32)

    # One teacher-forcing coin flip per decode step (ratio = 0.5), as in the
    # reference forward; drawn deterministically here (host-side torch.rand
    # has no in-kernel equivalent).
    teacher_forcing_ratio = 0.5
    tf_flags = (jax.random.uniform(k_tf, (T,)) < teacher_forcing_ratio).astype(jnp.int32)

    outputs = seq2seq_forward(source, target, tf_flags, params)
    outputs = jax.block_until_ready(outputs)

    assert outputs.shape == (B, T, TGT_V)
    assert bool(jnp.all(outputs[:, 0, :] == 0.0))
    assert bool(jnp.all(jnp.isfinite(outputs)))
    print("KERNEL_OK")
</pallas_src>

<mosaic_0001>
module attributes {stable_mosaic.version = 11 : i64} {
  func.func @seq2seq_kernel(%arg0: memref<8xi32, #tpu.memory_space<smem>>, %arg1: memref<64x32xf32, #tpu.memory_space<vmem>>, %arg2: memref<64x32xf32, #tpu.memory_space<vmem>>, %arg3: memref<128x32xf32, #tpu.memory_space<vmem>>, %arg4: memref<32x128xf32, #tpu.memory_space<vmem>>, %arg5: memref<32x128xbf16, #tpu.memory_space<vmem>>, %arg6: memref<1x128xf32, #tpu.memory_space<vmem>>, %arg7: memref<32x128xf32, #tpu.memory_space<vmem>>, %arg8: memref<32x128xbf16, #tpu.memory_space<vmem>>, %arg9: memref<1x128xf32, #tpu.memory_space<vmem>>, %arg10: memref<32x128xf32, #tpu.memory_space<vmem>>, %arg11: memref<1x128xf32, #tpu.memory_space<vmem>>, %arg12: memref<8x8x128xf32, #tpu.memory_space<vmem>>, %arg13: memref<56x32xf32, #tpu.memory_space<vmem>>) attributes {dimension_semantics = [], scalar_prefetch = 0 : i64, scratch_operands = 1 : i64, tpu.core_type = #tpu.core_type<tc>} {
    %c0 = arith.constant 0 : index
    %c0_0 = arith.constant 0 : index
    %0 = vector.load %arg1[%c0, %c0_0] : memref<64x32xf32, #tpu.memory_space<vmem>>, vector<64x32xf32>
    %c0_1 = arith.constant 0 : index
    %c0_2 = arith.constant 0 : index
    %1 = vector.load %arg4[%c0_1, %c0_2] : memref<32x128xf32, #tpu.memory_space<vmem>>, vector<32x128xf32>
    %cst = arith.constant dense<0.000000e+00> : vector<64x128xf32>
    %2 = tpu.matmul %0, %1, %cst {dimension_numbers = #tpu.dot_dimension_numbers<[1], [0], [0], [1], [0, 0, 1, 1], [], []>} : vector<64x32xf32>, vector<32x128xf32>, vector<64x128xf32> -> vector<64x128xf32>
    %c0_3 = arith.constant 0 : index
    %c0_4 = arith.constant 0 : index
    %3 = vector.load %arg6[%c0_3, %c0_4] : memref<1x128xf32, #tpu.memory_space<vmem>>, vector<1x128xf32>
    %4 = vector.broadcast %3 : vector<1x128xf32> to vector<64x128xf32>
    %5 = arith.addf %2, %4 : vector<64x128xf32>
    %c0_5 = arith.constant 0 : index
    %c0_6 = arith.constant 0 : index
    %6 = vector.load %arg5[%c0_5, %c0_6] : memref<32x128xbf16, #tpu.memory_space<vmem>>, vector<32x128xbf16>
    %cst_7 = arith.constant 0.000000e+00 : f32
    %7 = vector.broadcast %cst_7 : f32 to vector<8x32xf32>
    %cst_8 = arith.constant 0.000000e+00 : f32
    %8 = vector.broadcast %cst_8 : f32 to vector<8x32xf32>
    %9 = vector.extract_strided_slice %5 {offsets = [0, 0], sizes = [8, 128], strides = [1, 1]} : vector<64x128xf32> to vector<8x128xf32>
    %10 = arith.truncf %7 : vector<8x32xf32> to vector<8x32xbf16>
    %cst_9 = arith.constant dense<0.000000e+00> : vector<8x128xf32>
    %11 = tpu.matmul %10, %6, %cst_9 {dimension_numbers = #tpu.dot_dimension_numbers<[1], [0], [0], [1], [0, 0, 1, 1], [], []>} : vector<8x32xbf16>, vector<32x128xbf16>, vector<8x128xf32> -> vector<8x128xf32>
    %12 = arith.addf %9, %11 : vector<8x128xf32>
    %13 = arith.negf %12 : vector<8x128xf32>
    %14 = math.exp %13 : vector<8x128xf32>
    %cst_10 = arith.constant 1.000000e+00 : f32
    %15 = vector.broadcast %cst_10 : f32 to vector<8x128xf32>
    %16 = arith.addf %15, %14 : vector<8x128xf32>
    %17 = arith.divf %15, %16 : vector<8x128xf32>
    %18 = math.tanh %12 : vector<8x128xf32>
    %19 = vector.extract_strided_slice %17 {offsets = [0, 0], sizes = [8, 32], strides = [1, 1]} : vector<8x128xf32> to vector<8x32xf32>
    %20 = vector.extract_strided_slice %17 {offsets = [0, 32], sizes = [8, 32], strides = [1, 1]} : vector<8x128xf32> to vector<8x32xf32>
    %21 = vector.extract_strided_slice %17 {offsets = [0, 64], sizes = [8, 32], strides = [1, 1]} : vector<8x128xf32> to vector<8x32xf32>
    %22 = vector.extract_strided_slice %18 {offsets = [0, 96], sizes = [8, 32], strides = [1, 1]} : vector<8x128xf32> to vector<8x32xf32>
    %23 = arith.mulf %20, %8 : vector<8x32xf32>
    %24 = arith.mulf %19, %22 : vector<8x32xf32>
    %25 = arith.addf %23, %24 : vector<8x32xf32>
    %26 = math.tanh %25 : vector<8x32xf32>
    %27 = arith.mulf %21, %26 : vector<8x32xf32>
    %28 = vector.extract_strided_slice %5 {offsets = [8, 0], sizes = [8, 128], strides = [1, 1]} : vector<64x128xf32> to vector<8x128xf32>
    %29 = arith.truncf %27 : vector<8x32xf32> to vector<8x32xbf16>
    %cst_11 = arith.constant dense<0.000000e+00> : vector<8x128xf32>
    %30 = tpu.matmul %29, %6, %cst_11 {dimension_numbers = #tpu.dot_dimension_numbers<[1], [0], [0], [1], [0, 0, 1, 1], [], []>} : vector<8x32xbf16>, vector<32x128xbf16>, vector<8x128xf32> -> vector<8x128xf32>
    %31 = arith.addf %28, %30 : vector<8x128xf32>
    %32 = arith.negf %31 : vector<8x128xf32>
    %33 = math.exp %32 : vector<8x128xf32>
    %cst_12 = arith.constant 1.000000e+00 : f32
    %34 = vector.broadcast %cst_12 : f32 to vector<8x128xf32>
    %35 = arith.addf %34, %33 : vector<8x128xf32>
    %36 = arith.divf %34, %35 : vector<8x128xf32>
    %37 = math.tanh %31 : vector<8x128xf32>
    %38 = vector.extract_strided_slice %36 {offsets = [0, 0], sizes = [8, 32], strides = [1, 1]} : vector<8x128xf32> to vector<8x32xf32>
    %39 = vector.extract_strided_slice %36 {offsets = [0, 32], sizes = [8, 32], strides = [1, 1]} : vector<8x128xf32> to vector<8x32xf32>
    %40 = vector.extract_strided_slice %36 {offsets = [0, 64], sizes = [8, 32], strides = [1, 1]} : vector<8x128xf32> to vector<8x32xf32>
    %41 = vector.extract_strided_slice %37 {offsets = [0, 96], sizes = [8, 32], strides = [1, 1]} : vector<8x128xf32> to vector<8x32xf32>
    %42 = arith.mulf %39, %25 : vector<8x32xf32>
    %43 = arith.mulf %38, %41 : vector<8x32xf32>
    %44 = arith.addf %42, %43 : vector<8x32xf32>
    %45 = math.tanh %44 : vector<8x32xf32>
    %46 = arith.mulf %40, %45 : vector<8x32xf32>
    %47 = vector.extract_strided_slice %5 {offsets = [16, 0], sizes = [8, 128], strides = [1, 1]} : vector<64x128xf32> to vector<8x128xf32>
    %48 = arith.truncf %46 : vector<8x32xf32> to vector<8x32xbf16>
    %cst_13 = arith.constant dense<0.000000e+00> : vector<8x128xf32>
    %49 = tpu.matmul %48, %6, %cst_13 {dimension_numbers = #tpu.dot_dimension_numbers<[1], [0], [0], [1], [0, 0, 1, 1], [], []>} : vector<8x32xbf16>, vector<32x128xbf16>, vector<8x128xf32> -> vector<8x128xf32>
    %50 = arith.addf %47, %49 : vector<8x128xf32>
    %51 = arith.negf %50 : vector<8x128xf32>
    %52 = math.exp %51 : vector<8x128xf32>
    %cst_14 = arith.constant 1.000000e+00 : f32
    %53 = vector.broadcast %cst_14 : f32 to vector<8x128xf32>
    %54 = arith.addf %53, %52 : vector<8x128xf32>
    %55 = arith.divf %53, %54 : vector<8x128xf32>
    %56 = math.tanh %50 : vector<8x128xf32>
    %57 = vector.extract_strided_slice %55 {offsets = [0, 0], sizes = [8, 32], strides = [1, 1]} : vector<8x128xf32> to vector<8x32xf32>
    %58 = vector.extract_strided_slice %55 {offsets = [0, 32], sizes = [8, 32], strides = [1, 1]} : vector<8x128xf32> to vector<8x32xf32>
    %59 = vector.extract_strided_slice %55 {offsets = [0, 64], sizes = [8, 32], strides = [1, 1]} : vector<8x128xf32> to vector<8x32xf32>
    %60 = vector.extract_strided_slice %56 {offsets = [0, 96], sizes = [8, 32], strides = [1, 1]} : vector<8x128xf32> to vector<8x32xf32>
    %61 = arith.mulf %58, %44 : vector<8x32xf32>
    %62 = arith.mulf %57, %60 : vector<8x32xf32>
    %63 = arith.addf %61, %62 : vector<8x32xf32>
    %64 = math.tanh %63 : vector<8x32xf32>
    %65 = arith.mulf %59, %64 : vector<8x32xf32>
    %66 = vector.extract_strided_slice %5 {offsets = [24, 0], sizes = [8, 128], strides = [1, 1]} : vector<64x128xf32> to vector<8x128xf32>
    %67 = arith.truncf %65 : vector<8x32xf32> to vector<8x32xbf16>
    %cst_15 = arith.constant dense<0.000000e+00> : vector<8x128xf32>
    %68 = tpu.matmul %67, %6, %cst_15 {dimension_numbers = #tpu.dot_dimension_numbers<[1], [0], [0], [1], [0, 0, 1, 1], [], []>} : vector<8x32xbf16>, vector<32x128xbf16>, vector<8x128xf32> -> vector<8x128xf32>
    %69 = arith.addf %66, %68 : vector<8x128xf32>
    %70 = arith.negf %69 : vector<8x128xf32>
    %71 = math.exp %70 : vector<8x128xf32>
    %cst_16 = arith.constant 1.000000e+00 : f32
    %72 = vector.broadcast %cst_16 : f32 to vector<8x128xf32>
    %73 = arith.addf %72, %71 : vector<8x128xf32>
    %74 = arith.divf %72, %73 : vector<8x128xf32>
    %75 = math.tanh %69 : vector<8x128xf32>
    %76 = vector.extract_strided_slice %74 {offsets = [0, 0], sizes = [8, 32], strides = [1, 1]} : vector<8x128xf32> to vector<8x32xf32>
    %77 = vector.extract_strided_slice %74 {offsets = [0, 32], sizes = [8, 32], strides = [1, 1]} : vector<8x128xf32> to vector<8x32xf32>
    %78 = vector.extract_strided_slice %74 {offsets = [0, 64], sizes = [8, 32], strides = [1, 1]} : vector<8x128xf32> to vector<8x32xf32>
    %79 = vector.extract_strided_slice %75 {offsets = [0, 96], sizes = [8, 32], strides = [1, 1]} : vector<8x128xf32> to vector<8x32xf32>
    %80 = arith.mulf %77, %63 : vector<8x32xf32>
    %81 = arith.mulf %76, %79 : vector<8x32xf32>
    %82 = arith.addf %80, %81 : vector<8x32xf32>
    %83 = math.tanh %82 : vector<8x32xf32>
    %84 = arith.mulf %78, %83 : vector<8x32xf32>
    %85 = vector.extract_strided_slice %5 {offsets = [32, 0], sizes = [8, 128], strides = [1, 1]} : vector<64x128xf32> to vector<8x128xf32>
    %86 = arith.truncf %84 : vector<8x32xf32> to vector<8x32xbf16>
    %cst_17 = arith.constant dense<0.000000e+00> : vector<8x128xf32>
    %87 = tpu.matmul %86, %6, %cst_17 {dimension_numbers = #tpu.dot_dimension_numbers<[1], [0], [0], [1], [0, 0, 1, 1], [], []>} : vector<8x32xbf16>, vector<32x128xbf16>, vector<8x128xf32> -> vector<8x128xf32>
    %88 = arith.addf %85, %87 : vector<8x128xf32>
    %89 = arith.negf %88 : vector<8x128xf32>
    %90 = math.exp %89 : vector<8x128xf32>
    %cst_18 = arith.constant 1.000000e+00 : f32
    %91 = vector.broadcast %cst_18 : f32 to vector<8x128xf32>
    %92 = arith.addf %91, %90 : vector<8x128xf32>
    %93 = arith.divf %91, %92 : vector<8x128xf32>
    %94 = math.tanh %88 : vector<8x128xf32>
    %95 = vector.extract_strided_slice %93 {offsets = [0, 0], sizes = [8, 32], strides = [1, 1]} : vector<8x128xf32> to vector<8x32xf32>
    %96 = vector.extract_strided_slice %93 {offsets = [0, 32], sizes = [8, 32], strides = [1, 1]} : vector<8x128xf32> to vector<8x32xf32>
    %97 = vector.extract_strided_slice %93 {offsets = [0, 64], sizes = [8, 32], strides = [1, 1]} : vector<8x128xf32> to vector<8x32xf32>
    %98 = vector.extract_strided_slice %94 {offsets = [0, 96], sizes = [8, 32], strides = [1, 1]} : vector<8x128xf32> to vector<8x32xf32>
    %99 = arith.mulf %96, %82 : vector<8x32xf32>
    %100 = arith.mulf %95, %98 : vector<8x32xf32>
    %101 = arith.addf %99, %100 : vector<8x32xf32>
    %102 = math.tanh %101 : vector<8x32xf32>
    %103 = arith.mulf %97, %102 : vector<8x32xf32>
    %104 = vector.extract_strided_slice %5 {offsets = [40, 0], sizes = [8, 128], strides = [1, 1]} : vector<64x128xf32> to vector<8x128xf32>
    %105 = arith.truncf %103 : vector<8x32xf32> to vector<8x32xbf16>
    %cst_19 = arith.constant dense<0.000000e+00> : vector<8x128xf32>
    %106 = tpu.matmul %105, %6, %cst_19 {dimension_numbers = #tpu.dot_dimension_numbers<[1], [0], [0], [1], [0, 0, 1, 1], [], []>} : vector<8x32xbf16>, vector<32x128xbf16>, vector<8x128xf32> -> vector<8x128xf32>
    %107 = arith.addf %104, %106 : vector<8x128xf32>
    %108 = arith.negf %107 : vector<8x128xf32>
    %109 = math.exp %108 : vector<8x128xf32>
    %cst_20 = arith.constant 1.000000e+00 : f32
    %110 = vector.broadcast %cst_20 : f32 to vector<8x128xf32>
    %111 = arith.addf %110, %109 : vector<8x128xf32>
    %112 = arith.divf %110, %111 : vector<8x128xf32>
    %113 = math.tanh %107 : vector<8x128xf32>
    %114 = vector.extract_strided_slice %112 {offsets = [0, 0], sizes = [8, 32], strides = [1, 1]} : vector<8x128xf32> to vector<8x32xf32>
    %115 = vector.extract_strided_slice %112 {offsets = [0, 32], sizes = [8, 32], strides = [1, 1]} : vector<8x128xf32> to vector<8x32xf32>
    %116 = vector.extract_strided_slice %112 {offsets = [0, 64], sizes = [8, 32], strides = [1, 1]} : vector<8x128xf32> to vector<8x32xf32>
    %117 = vector.extract_strided_slice %113 {offsets = [0, 96], sizes = [8, 32], strides = [1, 1]} : vector<8x128xf32> to vector<8x32xf32>
    %118 = arith.mulf %115, %101 : vector<8x32xf32>
    %119 = arith.mulf %114, %117 : vector<8x32xf32>
    %120 = arith.addf %118, %119 : vector<8x32xf32>
    %121 = math.tanh %120 : vector<8x32xf32>
    %122 = arith.mulf %116, %121 : vector<8x32xf32>
    %123 = vector.extract_strided_slice %5 {offsets = [48, 0], sizes = [8, 128], strides = [1, 1]} : vector<64x128xf32> to vector<8x128xf32>
    %124 = arith.truncf %122 : vector<8x32xf32> to vector<8x32xbf16>
    %cst_21 = arith.constant dense<0.000000e+00> : vector<8x128xf32>
    %125 = tpu.matmul %124, %6, %cst_21 {dimension_numbers = #tpu.dot_dimension_numbers<[1], [0], [0], [1], [0, 0, 1, 1], [], []>} : vector<8x32xbf16>, vector<32x128xbf16>, vector<8x128xf32> -> vector<8x128xf32>
    %126 = arith.addf %123, %125 : vector<8x128xf32>
    %127 = arith.negf %126 : vector<8x128xf32>
    %128 = math.exp %127 : vector<8x128xf32>
    %cst_22 = arith.constant 1.000000e+00 : f32
    %129 = vector.broadcast %cst_22 : f32 to vector<8x128xf32>
    %130 = arith.addf %129, %128 : vector<8x128xf32>
    %131 = arith.divf %129, %130 : vector<8x128xf32>
    %132 = math.tanh %126 : vector<8x128xf32>
    %133 = vector.extract_strided_slice %131 {offsets = [0, 0], sizes = [8, 32], strides = [1, 1]} : vector<8x128xf32> to vector<8x32xf32>
    %134 = vector.extract_strided_slice %131 {offsets = [0, 32], sizes = [8, 32], strides = [1, 1]} : vector<8x128xf32> to vector<8x32xf32>
    %135 = vector.extract_strided_slice %131 {offsets = [0, 64], sizes = [8, 32], strides = [1, 1]} : vector<8x128xf32> to vector<8x32xf32>
    %136 = vector.extract_strided_slice %132 {offsets = [0, 96], sizes = [8, 32], strides = [1, 1]} : vector<8x128xf32> to vector<8x32xf32>
    %137 = arith.mulf %134, %120 : vector<8x32xf32>
    %138 = arith.mulf %133, %136 : vector<8x32xf32>
    %139 = arith.addf %137, %138 : vector<8x32xf32>
    %140 = math.tanh %139 : vector<8x32xf32>
    %141 = arith.mulf %135, %140 : vector<8x32xf32>
    %142 = vector.extract_strided_slice %5 {offsets = [56, 0], sizes = [8, 128], strides = [1, 1]} : vector<64x128xf32> to vector<8x128xf32>
    %143 = arith.truncf %141 : vector<8x32xf32> to vector<8x32xbf16>
    %cst_23 = arith.constant dense<0.000000e+00> : vector<8x128xf32>
    %144 = tpu.matmul %143, %6, %cst_23 {dimension_numbers = #tpu.dot_dimension_numbers<[1], [0], [0], [1], [0, 0, 1, 1], [], []>} : vector<8x32xbf16>, vector<32x128xbf16>, vector<8x128xf32> -> vector<8x128xf32>
    %145 = arith.addf %142, %144 : vector<8x128xf32>
    %146 = arith.negf %145 : vector<8x128xf32>
    %147 = math.exp %146 : vector<8x128xf32>
    %cst_24 = arith.constant 1.000000e+00 : f32
    %148 = vector.broadcast %cst_24 : f32 to vector<8x128xf32>
    %149 = arith.addf %148, %147 : vector<8x128xf32>
    %150 = arith.divf %148, %149 : vector<8x128xf32>
    %151 = math.tanh %145 : vector<8x128xf32>
    %152 = vector.extract_strided_slice %150 {offsets = [0, 0], sizes = [8, 32], strides = [1, 1]} : vector<8x128xf32> to vector<8x32xf32>
    %153 = vector.extract_strided_slice %150 {offsets = [0, 32], sizes = [8, 32], strides = [1, 1]} : vector<8x128xf32> to vector<8x32xf32>
    %154 = vector.extract_strided_slice %150 {offsets = [0, 64], sizes = [8, 32], strides = [1, 1]} : vector<8x128xf32> to vector<8x32xf32>
    %155 = vector.extract_strided_slice %151 {offsets = [0, 96], sizes = [8, 32], strides = [1, 1]} : vector<8x128xf32> to vector<8x32xf32>
    %156 = arith.mulf %153, %139 : vector<8x32xf32>
    %157 = arith.mulf %152, %155 : vector<8x32xf32>
    %158 = arith.addf %156, %157 : vector<8x32xf32>
    %159 = math.tanh %158 : vector<8x32xf32>
    %160 = arith.mulf %154, %159 : vector<8x32xf32>
    %c0_25 = arith.constant 0 : index
    %c0_26 = arith.constant 0 : index
    %161 = vector.load %arg2[%c0_25, %c0_26] : memref<64x32xf32, #tpu.memory_space<vmem>>, vector<64x32xf32>
    %c0_27 = arith.constant 0 : index
    %c0_28 = arith.constant 0 : index
    %162 = vector.load %arg7[%c0_27, %c0_28] : memref<32x128xf32, #tpu.memory_space<vmem>>, vector<32x128xf32>
    %cst_29 = arith.constant dense<0.000000e+00> : vector<64x128xf32>
    %163 = tpu.matmul %161, %162, %cst_29 {dimension_numbers = #tpu.dot_dimension_numbers<[1], [0], [0], [1], [0, 0, 1, 1], [], []>} : vector<64x32xf32>, vector<32x128xf32>, vector<64x128xf32> -> vector<64x128xf32>
    %c0_30 = arith.constant 0 : index
    %c0_31 = arith.constant 0 : index
    %164 = vector.load %arg9[%c0_30, %c0_31] : memref<1x128xf32, #tpu.memory_space<vmem>>, vector<1x128xf32>
    %165 = vector.broadcast %164 : vector<1x128xf32> to vector<64x128xf32>
    %166 = arith.addf %163, %165 : vector<64x128xf32>
    %c0_32 = arith.constant 0 : index
    %c0_33 = arith.constant 0 : index
    %167 = vector.load %arg3[%c0_32, %c0_33] : memref<128x32xf32, #tpu.memory_space<vmem>>, vector<128x32xf32>
    %c0_34 = arith.constant 0 : index
    %c0_35 = arith.constant 0 : index
    %168 = vector.load %arg7[%c0_34, %c0_35] : memref<32x128xf32, #tpu.memory_space<vmem>>, vector<32x128xf32>
    %cst_36 = arith.constant dense<0.000000e+00> : vector<128x128xf32>
    %169 = tpu.matmul %167, %168, %cst_36 {dimension_numbers = #tpu.dot_dimension_numbers<[1], [0], [0], [1], [0, 0, 1, 1], [], []>} : vector<128x32xf32>, vector<32x128xf32>, vector<128x128xf32> -> vector<128x128xf32>
    %c0_37 = arith.constant 0 : index
    %c0_38 = arith.constant 0 : index
    %170 = vector.load %arg9[%c0_37, %c0_38] : memref<1x128xf32, #tpu.memory_space<vmem>>, vector<1x128xf32>
    %171 = vector.broadcast %170 : vector<1x128xf32> to vector<128x128xf32>
    %172 = arith.addf %169, %171 : vector<128x128xf32>
    %c0_39 = arith.constant 0 : index
    %c0_40 = arith.constant 0 : index
    %173 = vector.load %arg8[%c0_39, %c0_40] : memref<32x128xbf16, #tpu.memory_space<vmem>>, vector<32x128xbf16>
    %174 = tpu.iota {dimensions = array<i32: 1>} : vector<8x128xi32>
    %175 = vector.extract_strided_slice %166 {offsets = [0, 0], sizes = [8, 128], strides = [1, 1]} : vector<64x128xf32> to vector<8x128xf32>
    %176 = arith.truncf %160 : vector<8x32xf32> to vector<8x32xbf16>
    %cst_41 = arith.constant dense<0.000000e+00> : vector<8x128xf32>
    %177 = tpu.matmul %176, %173, %cst_41 {dimension_numbers = #tpu.dot_dimension_numbers<[1], [0], [0], [1], [0, 0, 1, 1], [], []>} : vector<8x32xbf16>, vector<32x128xbf16>, vector<8x128xf32> -> vector<8x128xf32>
    %178 = arith.addf %175, %177 : vector<8x128xf32>
    %179 = arith.negf %178 : vector<8x128xf32>
    %180 = math.exp %179 : vector<8x128xf32>
    %cst_42 = arith.constant 1.000000e+00 : f32
    %181 = vector.broadcast %cst_42 : f32 to vector<8x128xf32>
    %182 = arith.addf %181, %180 : vector<8x128xf32>
    %183 = arith.divf %181, %182 : vector<8x128xf32>
    %184 = math.tanh %178 : vector<8x128xf32>
    %185 = vector.extract_strided_slice %183 {offsets = [0, 0], sizes = [8, 32], strides = [1, 1]} : vector<8x128xf32> to vector<8x32xf32>
    %186 = vector.extract_strided_slice %183 {offsets = [0, 32], sizes = [8, 32], strides = [1, 1]} : vector<8x128xf32> to vector<8x32xf32>
    %187 = vector.extract_strided_slice %183 {offsets = [0, 64], sizes = [8, 32], strides = [1, 1]} : vector<8x128xf32> to vector<8x32xf32>
    %188 = vector.extract_strided_slice %184 {offsets = [0, 96], sizes = [8, 32], strides = [1, 1]} : vector<8x128xf32> to vector<8x32xf32>
    %189 = arith.mulf %186, %158 : vector<8x32xf32>
    %190 = arith.mulf %185, %188 : vector<8x32xf32>
    %191 = arith.addf %189, %190 : vector<8x32xf32>
    %192 = math.tanh %191 : vector<8x32xf32>
    %193 = arith.mulf %187, %192 : vector<8x32xf32>
    %c0_43 = arith.constant 0 : index
    %c0_44 = arith.constant 0 : index
    %194 = vector.load %arg13[%c0_43, %c0_44] : memref<56x32xf32, #tpu.memory_space<vmem>>, vector<8x32xf32>
    tpu.vector_store %arg13[%c0_43, %c0_44], %193 {strides = array<i32>} : memref<56x32xf32, #tpu.memory_space<vmem>>, vector<8x32xf32>,
    %c1 = arith.constant 1 : index
    %195 = memref.load %arg0[%c1] : memref<8xi32, #tpu.memory_space<smem>>
    %c1_i32 = arith.constant 1 : i32
    %196 = arith.cmpi eq, %195, %c1_i32 : i32
    %197 = arith.extui %196 : i1 to i32
    %c0_i32 = arith.constant 0 : i32
    %198 = arith.cmpi ne, %197, %c0_i32 : i32
    %199 = scf.if %198 -> (vector<8x128xf32>) {
      %351 = vector.extract_strided_slice %166 {offsets = [8, 0], sizes = [8, 128], strides = [1, 1]} : vector<64x128xf32> to vector<8x128xf32>
      scf.yield %351 : vector<8x128xf32>
    } else {
      %c0_87 = arith.constant 0 : index
      %c0_88 = arith.constant 0 : index
      %351 = vector.load %arg10[%c0_87, %c0_88] : memref<32x128xf32, #tpu.memory_space<vmem>>, vector<32x128xf32>
      %cst_89 = arith.constant dense<0.000000e+00> : vector<8x128xf32>
      %352 = tpu.matmul %193, %351, %cst_89 {dimension_numbers = #tpu.dot_dimension_numbers<[1], [0], [0], [1], [0, 0, 1, 1], [], []>} : vector<8x32xf32>, vector<32x128xf32>, vector<8x128xf32> -> vector<8x128xf32>
      %c0_90 = arith.constant 0 : index
      %c0_91 = arith.constant 0 : index
      %353 = vector.load %arg11[%c0_90, %c0_91] : memref<1x128xf32, #tpu.memory_space<vmem>>, vector<1x128xf32>
      %354 = vector.broadcast %353 : vector<1x128xf32> to vector<8x128xf32>
      %355 = arith.addf %352, %354 : vector<8x128xf32>
      %cst_92 = arith.constant dense<0xFF800000> : vector<8xf32>
      %356 = vector.multi_reduction <maximumf>, %355, %cst_92 [1] : vector<8x128xf32> to vector<8xf32>
      %357 = vector.shape_cast %356 : vector<8xf32> to vector<8x1xf32>
      %358 = vector.broadcast %357 : vector<8x1xf32> to vector<8x128xf32>
      %359 = arith.cmpf oeq, %355, %358 : vector<8x128xf32>
      %c128_i32 = arith.constant 128 : i32
      %360 = vector.broadcast %c128_i32 : i32 to vector<8x128xi32>
      %361 = arith.select %359, %174, %360 : vector<8x128xi1>, vector<8x128xi32>
      %cst_93 = arith.constant dense<2147483647> : vector<8xi32>
      %362 = vector.multi_reduction <minsi>, %361, %cst_93 [1] : vector<8x128xi32> to vector<8xi32>
      %363 = vector.shape_cast %362 : vector<8xi32> to vector<8x1xi32>
      %364 = vector.broadcast %363 : vector<8x1xi32> to vector<8x128xi32>
      %365 = arith.cmpi eq, %174, %364 : vector<8x128xi32>
      %366 = arith.extui %365 : vector<8x128xi1> to vector<8x128xi32>
      %367 = arith.sitofp %366 : vector<8x128xi32> to vector<8x128xf32>
      %cst_94 = arith.constant dense<0.000000e+00> : vector<8x128xf32>
      %368 = tpu.matmul %367, %172, %cst_94 {dimension_numbers = #tpu.dot_dimension_numbers<[1], [0], [0], [1], [0, 0, 1, 1], [], []>} : vector<8x128xf32>, vector<128x128xf32>, vector<8x128xf32> -> vector<8x128xf32>
      scf.yield %368 : vector<8x128xf32>
    }
    %200 = arith.truncf %193 : vector<8x32xf32> to vector<8x32xbf16>
    %cst_45 = arith.constant dense<0.000000e+00> : vector<8x128xf32>
    %201 = tpu.matmul %200, %173, %cst_45 {dimension_numbers = #tpu.dot_dimension_numbers<[1], [0], [0], [1], [0, 0, 1, 1], [], []>} : vector<8x32xbf16>, vector<32x128xbf16>, vector<8x128xf32> -> vector<8x128xf32>
    %202 = arith.addf %199, %201 : vector<8x128xf32>
    %203 = arith.negf %202 : vector<8x128xf32>
    %204 = math.exp %203 : vector<8x128xf32>
    %cst_46 = arith.constant 1.000000e+00 : f32
    %205 = vector.broadcast %cst_46 : f32 to vector<8x128xf32>
    %206 = arith.addf %205, %204 : vector<8x128xf32>
    %207 = arith.divf %205, %206 : vector<8x128xf32>
    %208 = math.tanh %202 : vector<8x128xf32>
    %209 = vector.extract_strided_slice %207 {offsets = [0, 0], sizes = [8, 32], strides = [1, 1]} : vector<8x128xf32> to vector<8x32xf32>
    %210 = vector.extract_strided_slice %207 {offsets = [0, 32], sizes = [8, 32], strides = [1, 1]} : vector<8x128xf32> to vector<8x32xf32>
    %211 = vector.extract_strided_slice %207 {offsets = [0, 64], sizes = [8, 32], strides = [1, 1]} : vector<8x128xf32> to vector<8x32xf32>
    %212 = vector.extract_strided_slice %208 {offsets = [0, 96], sizes = [8, 32], strides = [1, 1]} : vector<8x128xf32> to vector<8x32xf32>
    %213 = arith.mulf %210, %191 : vector<8x32xf32>
    %214 = arith.mulf %209, %212 : vector<8x32xf32>
    %215 = arith.addf %213, %214 : vector<8x32xf32>
    %216 = math.tanh %215 : vector<8x32xf32>
    %217 = arith.mulf %211, %216 : vector<8x32xf32>
    %c8 = arith.constant 8 : index
    %c0_47 = arith.constant 0 : index
    %218 = vector.load %arg13[%c8, %c0_47] : memref<56x32xf32, #tpu.memory_space<vmem>>, vector<8x32xf32>
    tpu.vector_store %arg13[%c8, %c0_47], %217 {strides = array<i32>} : memref<56x32xf32, #tpu.memory_space<vmem>>, vector<8x32xf32>,
    %c2 = arith.constant 2 : index
    %219 = memref.load %arg0[%c2] : memref<8xi32, #tpu.memory_space<smem>>
    %c1_i32_48 = arith.constant 1 : i32
    %220 = arith.cmpi eq, %219, %c1_i32_48 : i32
    %221 = arith.extui %220 : i1 to i32
    %c0_i32_49 = arith.constant 0 : i32
    %222 = arith.cmpi ne, %221, %c0_i32_49 : i32
    %223 = scf.if %222 -> (vector<8x128xf32>) {
      %351 = vector.extract_strided_slice %166 {offsets = [16, 0], sizes = [8, 128], strides = [1, 1]} : vector<64x128xf32> to vector<8x128xf32>
      scf.yield %351 : vector<8x128xf32>
    } else {
      %c0_87 = arith.constant 0 : index
      %c0_88 = arith.constant 0 : index
      %351 = vector.load %arg10[%c0_87, %c0_88] : memref<32x128xf32, #tpu.memory_space<vmem>>, vector<32x128xf32>
      %cst_89 = arith.constant dense<0.000000e+00> : vector<8x128xf32>
      %352 = tpu.matmul %217, %351, %cst_89 {dimension_numbers = #tpu.dot_dimension_numbers<[1], [0], [0], [1], [0, 0, 1, 1], [], []>} : vector<8x32xf32>, vector<32x128xf32>, vector<8x128xf32> -> vector<8x128xf32>
      %c0_90 = arith.constant 0 : index
      %c0_91 = arith.constant 0 : index
      %353 = vector.load %arg11[%c0_90, %c0_91] : memref<1x128xf32, #tpu.memory_space<vmem>>, vector<1x128xf32>
      %354 = vector.broadcast %353 : vector<1x128xf32> to vector<8x128xf32>
      %355 = arith.addf %352, %354 : vector<8x128xf32>
      %cst_92 = arith.constant dense<0xFF800000> : vector<8xf32>
      %356 = vector.multi_reduction <maximumf>, %355, %cst_92 [1] : vector<8x128xf32> to vector<8xf32>
      %357 = vector.shape_cast %356 : vector<8xf32> to vector<8x1xf32>
      %358 = vector.broadcast %357 : vector<8x1xf32> to vector<8x128xf32>
      %359 = arith.cmpf oeq, %355, %358 : vector<8x128xf32>
      %c128_i32 = arith.constant 128 : i32
      %360 = vector.broadcast %c128_i32 : i32 to vector<8x128xi32>
      %361 = arith.select %359, %174, %360 : vector<8x128xi1>, vector<8x128xi32>
      %cst_93 = arith.constant dense<2147483647> : vector<8xi32>
      %362 = vector.multi_reduction <minsi>, %361, %cst_93 [1] : vector<8x128xi32> to vector<8xi32>
      %363 = vector.shape_cast %362 : vector<8xi32> to vector<8x1xi32>
      %364 = vector.broadcast %363 : vector<8x1xi32> to vector<8x128xi32>
      %365 = arith.cmpi eq, %174, %364 : vector<8x128xi32>
      %366 = arith.extui %365 : vector<8x128xi1> to vector<8x128xi32>
      %367 = arith.sitofp %366 : vector<8x128xi32> to vector<8x128xf32>
      %cst_94 = arith.constant dense<0.000000e+00> : vector<8x128xf32>
      %368 = tpu.matmul %367, %172, %cst_94 {dimension_numbers = #tpu.dot_dimension_numbers<[1], [0], [0], [1], [0, 0, 1, 1], [], []>} : vector<8x128xf32>, vector<128x128xf32>, vector<8x128xf32> -> vector<8x128xf32>
      scf.yield %368 : vector<8x128xf32>
    }
    %224 = arith.truncf %217 : vector<8x32xf32> to vector<8x32xbf16>
    %cst_50 = arith.constant dense<0.000000e+00> : vector<8x128xf32>
    %225 = tpu.matmul %224, %173, %cst_50 {dimension_numbers = #tpu.dot_dimension_numbers<[1], [0], [0], [1], [0, 0, 1, 1], [], []>} : vector<8x32xbf16>, vector<32x128xbf16>, vector<8x128xf32> -> vector<8x128xf32>
    %226 = arith.addf %223, %225 : vector<8x128xf32>
    %227 = arith.negf %226 : vector<8x128xf32>
    %228 = math.exp %227 : vector<8x128xf32>
    %cst_51 = arith.constant 1.000000e+00 : f32
    %229 = vector.broadcast %cst_51 : f32 to vector<8x128xf32>
    %230 = arith.addf %229, %228 : vector<8x128xf32>
    %231 = arith.divf %229, %230 : vector<8x128xf32>
    %232 = math.tanh %226 : vector<8x128xf32>
    %233 = vector.extract_strided_slice %231 {offsets = [0, 0], sizes = [8, 32], strides = [1, 1]} : vector<8x128xf32> to vector<8x32xf32>
    %234 = vector.extract_strided_slice %231 {offsets = [0, 32], sizes = [8, 32], strides = [1, 1]} : vector<8x128xf32> to vector<8x32xf32>
    %235 = vector.extract_strided_slice %231 {offsets = [0, 64], sizes = [8, 32], strides = [1, 1]} : vector<8x128xf32> to vector<8x32xf32>
    %236 = vector.extract_strided_slice %232 {offsets = [0, 96], sizes = [8, 32], strides = [1, 1]} : vector<8x128xf32> to vector<8x32xf32>
    %237 = arith.mulf %234, %215 : vector<8x32xf32>
    %238 = arith.mulf %233, %236 : vector<8x32xf32>
    %239 = arith.addf %237, %238 : vector<8x32xf32>
    %240 = math.tanh %239 : vector<8x32xf32>
    %241 = arith.mulf %235, %240 : vector<8x32xf32>
    %c16 = arith.constant 16 : index
    %c0_52 = arith.constant 0 : index
    %242 = vector.load %arg13[%c16, %c0_52] : memref<56x32xf32, #tpu.memory_space<vmem>>, vector<8x32xf32>
    tpu.vector_store %arg13[%c16, %c0_52], %241 {strides = array<i32>} : memref<56x32xf32, #tpu.memory_space<vmem>>, vector<8x32xf32>,
    %c3 = arith.constant 3 : index
    %243 = memref.load %arg0[%c3] : memref<8xi32, #tpu.memory_space<smem>>
    %c1_i32_53 = arith.constant 1 : i32
    %244 = arith.cmpi eq, %243, %c1_i32_53 : i32
    %245 = arith.extui %244 : i1 to i32
    %c0_i32_54 = arith.constant 0 : i32
    %246 = arith.cmpi ne, %245, %c0_i32_54 : i32
    %247 = scf.if %246 -> (vector<8x128xf32>) {
      %351 = vector.extract_strided_slice %166 {offsets = [24, 0], sizes = [8, 128], strides = [1, 1]} : vector<64x128xf32> to vector<8x128xf32>
      scf.yield %351 : vector<8x128xf32>
    } else {
      %c0_87 = arith.constant 0 : index
      %c0_88 = arith.constant 0 : index
      %351 = vector.load %arg10[%c0_87, %c0_88] : memref<32x128xf32, #tpu.memory_space<vmem>>, vector<32x128xf32>
      %cst_89 = arith.constant dense<0.000000e+00> : vector<8x128xf32>
      %352 = tpu.matmul %241, %351, %cst_89 {dimension_numbers = #tpu.dot_dimension_numbers<[1], [0], [0], [1], [0, 0, 1, 1], [], []>} : vector<8x32xf32>, vector<32x128xf32>, vector<8x128xf32> -> vector<8x128xf32>
      %c0_90 = arith.constant 0 : index
      %c0_91 = arith.constant 0 : index
      %353 = vector.load %arg11[%c0_90, %c0_91] : memref<1x128xf32, #tpu.memory_space<vmem>>, vector<1x128xf32>
      %354 = vector.broadcast %353 : vector<1x128xf32> to vector<8x128xf32>
      %355 = arith.addf %352, %354 : vector<8x128xf32>
      %cst_92 = arith.constant dense<0xFF800000> : vector<8xf32>
      %356 = vector.multi_reduction <maximumf>, %355, %cst_92 [1] : vector<8x128xf32> to vector<8xf32>
      %357 = vector.shape_cast %356 : vector<8xf32> to vector<8x1xf32>
      %358 = vector.broadcast %357 : vector<8x1xf32> to vector<8x128xf32>
      %359 = arith.cmpf oeq, %355, %358 : vector<8x128xf32>
      %c128_i32 = arith.constant 128 : i32
      %360 = vector.broadcast %c128_i32 : i32 to vector<8x128xi32>
      %361 = arith.select %359, %174, %360 : vector<8x128xi1>, vector<8x128xi32>
      %cst_93 = arith.constant dense<2147483647> : vector<8xi32>
      %362 = vector.multi_reduction <minsi>, %361, %cst_93 [1] : vector<8x128xi32> to vector<8xi32>
      %363 = vector.shape_cast %362 : vector<8xi32> to vector<8x1xi32>
      %364 = vector.broadcast %363 : vector<8x1xi32> to vector<8x128xi32>
      %365 = arith.cmpi eq, %174, %364 : vector<8x128xi32>
      %366 = arith.extui %365 : vector<8x128xi1> to vector<8x128xi32>
      %367 = arith.sitofp %366 : vector<8x128xi32> to vector<8x128xf32>
      %cst_94 = arith.constant dense<0.000000e+00> : vector<8x128xf32>
      %368 = tpu.matmul %367, %172, %cst_94 {dimension_numbers = #tpu.dot_dimension_numbers<[1], [0], [0], [1], [0, 0, 1, 1], [], []>} : vector<8x128xf32>, vector<128x128xf32>, vector<8x128xf32> -> vector<8x128xf32>
      scf.yield %368 : vector<8x128xf32>
    }
    %248 = arith.truncf %241 : vector<8x32xf32> to vector<8x32xbf16>
    %cst_55 = arith.constant dense<0.000000e+00> : vector<8x128xf32>
    %249 = tpu.matmul %248, %173, %cst_55 {dimension_numbers = #tpu.dot_dimension_numbers<[1], [0], [0], [1], [0, 0, 1, 1], [], []>} : vector<8x32xbf16>, vector<32x128xbf16>, vector<8x128xf32> -> vector<8x128xf32>
    %250 = arith.addf %247, %249 : vector<8x128xf32>
    %251 = arith.negf %250 : vector<8x128xf32>
    %252 = math.exp %251 : vector<8x128xf32>
    %cst_56 = arith.constant 1.000000e+00 : f32
    %253 = vector.broadcast %cst_56 : f32 to vector<8x128xf32>
    %254 = arith.addf %253, %252 : vector<8x128xf32>
    %255 = arith.divf %253, %254 : vector<8x128xf32>
    %256 = math.tanh %250 : vector<8x128xf32>
    %257 = vector.extract_strided_slice %255 {offsets = [0, 0], sizes = [8, 32], strides = [1, 1]} : vector<8x128xf32> to vector<8x32xf32>
    %258 = vector.extract_strided_slice %255 {offsets = [0, 32], sizes = [8, 32], strides = [1, 1]} : vector<8x128xf32> to vector<8x32xf32>
    %259 = vector.extract_strided_slice %255 {offsets = [0, 64], sizes = [8, 32], strides = [1, 1]} : vector<8x128xf32> to vector<8x32xf32>
    %260 = vector.extract_strided_slice %256 {offsets = [0, 96], sizes = [8, 32], strides = [1, 1]} : vector<8x128xf32> to vector<8x32xf32>
    %261 = arith.mulf %258, %239 : vector<8x32xf32>
    %262 = arith.mulf %257, %260 : vector<8x32xf32>
    %263 = arith.addf %261, %262 : vector<8x32xf32>
    %264 = math.tanh %263 : vector<8x32xf32>
    %265 = arith.mulf %259, %264 : vector<8x32xf32>
    %c24 = arith.constant 24 : index
    %c0_57 = arith.constant 0 : index
    %266 = vector.load %arg13[%c24, %c0_57] : memref<56x32xf32, #tpu.memory_space<vmem>>, vector<8x32xf32>
    tpu.vector_store %arg13[%c24, %c0_57], %265 {strides = array<i32>} : memref<56x32xf32, #tpu.memory_space<vmem>>, vector<8x32xf32>,
    %c4 = arith.constant 4 : index
    %267 = memref.load %arg0[%c4] : memref<8xi32, #tpu.memory_space<smem>>
    %c1_i32_58 = arith.constant 1 : i32
    %268 = arith.cmpi eq, %267, %c1_i32_58 : i32
    %269 = arith.extui %268 : i1 to i32
    %c0_i32_59 = arith.constant 0 : i32
    %270 = arith.cmpi ne, %269, %c0_i32_59 : i32
    %271 = scf.if %270 -> (vector<8x128xf32>) {
      %351 = vector.extract_strided_slice %166 {offsets = [32, 0], sizes = [8, 128], strides = [1, 1]} : vector<64x128xf32> to vector<8x128xf32>
      scf.yield %351 : vector<8x128xf32>
    } else {
      %c0_87 = arith.constant 0 : index
      %c0_88 = arith.constant 0 : index
      %351 = vector.load %arg10[%c0_87, %c0_88] : memref<32x128xf32, #tpu.memory_space<vmem>>, vector<32x128xf32>
      %cst_89 = arith.constant dense<0.000000e+00> : vector<8x128xf32>
      %352 = tpu.matmul %265, %351, %cst_89 {dimension_numbers = #tpu.dot_dimension_numbers<[1], [0], [0], [1], [0, 0, 1, 1], [], []>} : vector<8x32xf32>, vector<32x128xf32>, vector<8x128xf32> -> vector<8x128xf32>
      %c0_90 = arith.constant 0 : index
      %c0_91 = arith.constant 0 : index
      %353 = vector.load %arg11[%c0_90, %c0_91] : memref<1x128xf32, #tpu.memory_space<vmem>>, vector<1x128xf32>
      %354 = vector.broadcast %353 : vector<1x128xf32> to vector<8x128xf32>
      %355 = arith.addf %352, %354 : vector<8x128xf32>
      %cst_92 = arith.constant dense<0xFF800000> : vector<8xf32>
      %356 = vector.multi_reduction <maximumf>, %355, %cst_92 [1] : vector<8x128xf32> to vector<8xf32>
      %357 = vector.shape_cast %356 : vector<8xf32> to vector<8x1xf32>
      %358 = vector.broadcast %357 : vector<8x1xf32> to vector<8x128xf32>
      %359 = arith.cmpf oeq, %355, %358 : vector<8x128xf32>
      %c128_i32 = arith.constant 128 : i32
      %360 = vector.broadcast %c128_i32 : i32 to vector<8x128xi32>
      %361 = arith.select %359, %174, %360 : vector<8x128xi1>, vector<8x128xi32>
      %cst_93 = arith.constant dense<2147483647> : vector<8xi32>
      %362 = vector.multi_reduction <minsi>, %361, %cst_93 [1] : vector<8x128xi32> to vector<8xi32>
      %363 = vector.shape_cast %362 : vector<8xi32> to vector<8x1xi32>
      %364 = vector.broadcast %363 : vector<8x1xi32> to vector<8x128xi32>
      %365 = arith.cmpi eq, %174, %364 : vector<8x128xi32>
      %366 = arith.extui %365 : vector<8x128xi1> to vector<8x128xi32>
      %367 = arith.sitofp %366 : vector<8x128xi32> to vector<8x128xf32>
      %cst_94 = arith.constant dense<0.000000e+00> : vector<8x128xf32>
      %368 = tpu.matmul %367, %172, %cst_94 {dimension_numbers = #tpu.dot_dimension_numbers<[1], [0], [0], [1], [0, 0, 1, 1], [], []>} : vector<8x128xf32>, vector<128x128xf32>, vector<8x128xf32> -> vector<8x128xf32>
      scf.yield %368 : vector<8x128xf32>
    }
    %272 = arith.truncf %265 : vector<8x32xf32> to vector<8x32xbf16>
    %cst_60 = arith.constant dense<0.000000e+00> : vector<8x128xf32>
    %273 = tpu.matmul %272, %173, %cst_60 {dimension_numbers = #tpu.dot_dimension_numbers<[1], [0], [0], [1], [0, 0, 1, 1], [], []>} : vector<8x32xbf16>, vector<32x128xbf16>, vector<8x128xf32> -> vector<8x128xf32>
    %274 = arith.addf %271, %273 : vector<8x128xf32>
    %275 = arith.negf %274 : vector<8x128xf32>
    %276 = math.exp %275 : vector<8x128xf32>
    %cst_61 = arith.constant 1.000000e+00 : f32
    %277 = vector.broadcast %cst_61 : f32 to vector<8x128xf32>
    %278 = arith.addf %277, %276 : vector<8x128xf32>
    %279 = arith.divf %277, %278 : vector<8x128xf32>
    %280 = math.tanh %274 : vector<8x128xf32>
    %281 = vector.extract_strided_slice %279 {offsets = [0, 0], sizes = [8, 32], strides = [1, 1]} : vector<8x128xf32> to vector<8x32xf32>
    %282 = vector.extract_strided_slice %279 {offsets = [0, 32], sizes = [8, 32], strides = [1, 1]} : vector<8x128xf32> to vector<8x32xf32>
    %283 = vector.extract_strided_slice %279 {offsets = [0, 64], sizes = [8, 32], strides = [1, 1]} : vector<8x128xf32> to vector<8x32xf32>
    %284 = vector.extract_strided_slice %280 {offsets = [0, 96], sizes = [8, 32], strides = [1, 1]} : vector<8x128xf32> to vector<8x32xf32>
    %285 = arith.mulf %282, %263 : vector<8x32xf32>
    %286 = arith.mulf %281, %284 : vector<8x32xf32>
    %287 = arith.addf %285, %286 : vector<8x32xf32>
    %288 = math.tanh %287 : vector<8x32xf32>
    %289 = arith.mulf %283, %288 : vector<8x32xf32>
    %c32 = arith.constant 32 : index
    %c0_62 = arith.constant 0 : index
    %290 = vector.load %arg13[%c32, %c0_62] : memref<56x32xf32, #tpu.memory_space<vmem>>, vector<8x32xf32>
    tpu.vector_store %arg13[%c32, %c0_62], %289 {strides = array<i32>} : memref<56x32xf32, #tpu.memory_space<vmem>>, vector<8x32xf32>,
    %c5 = arith.constant 5 : index
    %291 = memref.load %arg0[%c5] : memref<8xi32, #tpu.memory_space<smem>>
    %c1_i32_63 = arith.constant 1 : i32
    %292 = arith.cmpi eq, %291, %c1_i32_63 : i32
    %293 = arith.extui %292 : i1 to i32
    %c0_i32_64 = arith.constant 0 : i32
    %294 = arith.cmpi ne, %293, %c0_i32_64 : i32
    %295 = scf.if %294 -> (vector<8x128xf32>) {
      %351 = vector.extract_strided_slice %166 {offsets = [40, 0], sizes = [8, 128], strides = [1, 1]} : vector<64x128xf32> to vector<8x128xf32>
      scf.yield %351 : vector<8x128xf32>
    } else {
      %c0_87 = arith.constant 0 : index
      %c0_88 = arith.constant 0 : index
      %351 = vector.load %arg10[%c0_87, %c0_88] : memref<32x128xf32, #tpu.memory_space<vmem>>, vector<32x128xf32>
      %cst_89 = arith.constant dense<0.000000e+00> : vector<8x128xf32>
      %352 = tpu.matmul %289, %351, %cst_89 {dimension_numbers = #tpu.dot_dimension_numbers<[1], [0], [0], [1], [0, 0, 1, 1], [], []>} : vector<8x32xf32>, vector<32x128xf32>, vector<8x128xf32> -> vector<8x128xf32>
      %c0_90 = arith.constant 0 : index
      %c0_91 = arith.constant 0 : index
      %353 = vector.load %arg11[%c0_90, %c0_91] : memref<1x128xf32, #tpu.memory_space<vmem>>, vector<1x128xf32>
      %354 = vector.broadcast %353 : vector<1x128xf32> to vector<8x128xf32>
      %355 = arith.addf %352, %354 : vector<8x128xf32>
      %cst_92 = arith.constant dense<0xFF800000> : vector<8xf32>
      %356 = vector.multi_reduction <maximumf>, %355, %cst_92 [1] : vector<8x128xf32> to vector<8xf32>
      %357 = vector.shape_cast %356 : vector<8xf32> to vector<8x1xf32>
      %358 = vector.broadcast %357 : vector<8x1xf32> to vector<8x128xf32>
      %359 = arith.cmpf oeq, %355, %358 : vector<8x128xf32>
      %c128_i32 = arith.constant 128 : i32
      %360 = vector.broadcast %c128_i32 : i32 to vector<8x128xi32>
      %361 = arith.select %359, %174, %360 : vector<8x128xi1>, vector<8x128xi32>
      %cst_93 = arith.constant dense<2147483647> : vector<8xi32>
      %362 = vector.multi_reduction <minsi>, %361, %cst_93 [1] : vector<8x128xi32> to vector<8xi32>
      %363 = vector.shape_cast %362 : vector<8xi32> to vector<8x1xi32>
      %364 = vector.broadcast %363 : vector<8x1xi32> to vector<8x128xi32>
      %365 = arith.cmpi eq, %174, %364 : vector<8x128xi32>
      %366 = arith.extui %365 : vector<8x128xi1> to vector<8x128xi32>
      %367 = arith.sitofp %366 : vector<8x128xi32> to vector<8x128xf32>
      %cst_94 = arith.constant dense<0.000000e+00> : vector<8x128xf32>
      %368 = tpu.matmul %367, %172, %cst_94 {dimension_numbers = #tpu.dot_dimension_numbers<[1], [0], [0], [1], [0, 0, 1, 1], [], []>} : vector<8x128xf32>, vector<128x128xf32>, vector<8x128xf32> -> vector<8x128xf32>
      scf.yield %368 : vector<8x128xf32>
    }
    %296 = arith.truncf %289 : vector<8x32xf32> to vector<8x32xbf16>
    %cst_65 = arith.constant dense<0.000000e+00> : vector<8x128xf32>
    %297 = tpu.matmul %296, %173, %cst_65 {dimension_numbers = #tpu.dot_dimension_numbers<[1], [0], [0], [1], [0, 0, 1, 1], [], []>} : vector<8x32xbf16>, vector<32x128xbf16>, vector<8x128xf32> -> vector<8x128xf32>
    %298 = arith.addf %295, %297 : vector<8x128xf32>
    %299 = arith.negf %298 : vector<8x128xf32>
    %300 = math.exp %299 : vector<8x128xf32>
    %cst_66 = arith.constant 1.000000e+00 : f32
    %301 = vector.broadcast %cst_66 : f32 to vector<8x128xf32>
    %302 = arith.addf %301, %300 : vector<8x128xf32>
    %303 = arith.divf %301, %302 : vector<8x128xf32>
    %304 = math.tanh %298 : vector<8x128xf32>
    %305 = vector.extract_strided_slice %303 {offsets = [0, 0], sizes = [8, 32], strides = [1, 1]} : vector<8x128xf32> to vector<8x32xf32>
    %306 = vector.extract_strided_slice %303 {offsets = [0, 32], sizes = [8, 32], strides = [1, 1]} : vector<8x128xf32> to vector<8x32xf32>
    %307 = vector.extract_strided_slice %303 {offsets = [0, 64], sizes = [8, 32], strides = [1, 1]} : vector<8x128xf32> to vector<8x32xf32>
    %308 = vector.extract_strided_slice %304 {offsets = [0, 96], sizes = [8, 32], strides = [1, 1]} : vector<8x128xf32> to vector<8x32xf32>
    %309 = arith.mulf %306, %287 : vector<8x32xf32>
    %310 = arith.mulf %305, %308 : vector<8x32xf32>
    %311 = arith.addf %309, %310 : vector<8x32xf32>
    %312 = math.tanh %311 : vector<8x32xf32>
    %313 = arith.mulf %307, %312 : vector<8x32xf32>
    %c40 = arith.constant 40 : index
    %c0_67 = arith.constant 0 : index
    %314 = vector.load %arg13[%c40, %c0_67] : memref<56x32xf32, #tpu.memory_space<vmem>>, vector<8x32xf32>
    tpu.vector_store %arg13[%c40, %c0_67], %313 {strides = array<i32>} : memref<56x32xf32, #tpu.memory_space<vmem>>, vector<8x32xf32>,
    %c6 = arith.constant 6 : index
    %315 = memref.load %arg0[%c6] : memref<8xi32, #tpu.memory_space<smem>>
    %c1_i32_68 = arith.constant 1 : i32
    %316 = arith.cmpi eq, %315, %c1_i32_68 : i32
    %317 = arith.extui %316 : i1 to i32
    %c0_i32_69 = arith.constant 0 : i32
    %318 = arith.cmpi ne, %317, %c0_i32_69 : i32
    %319 = scf.if %318 -> (vector<8x128xf32>) {
      %351 = vector.extract_strided_slice %166 {offsets = [48, 0], sizes = [8, 128], strides = [1, 1]} : vector<64x128xf32> to vector<8x128xf32>
      scf.yield %351 : vector<8x128xf32>
    } else {
      %c0_87 = arith.constant 0 : index
      %c0_88 = arith.constant 0 : index
      %351 = vector.load %arg10[%c0_87, %c0_88] : memref<32x128xf32, #tpu.memory_space<vmem>>, vector<32x128xf32>
      %cst_89 = arith.constant dense<0.000000e+00> : vector<8x128xf32>
      %352 = tpu.matmul %313, %351, %cst_89 {dimension_numbers = #tpu.dot_dimension_numbers<[1], [0], [0], [1], [0, 0, 1, 1], [], []>} : vector<8x32xf32>, vector<32x128xf32>, vector<8x128xf32> -> vector<8x128xf32>
      %c0_90 = arith.constant 0 : index
      %c0_91 = arith.constant 0 : index
      %353 = vector.load %arg11[%c0_90, %c0_91] : memref<1x128xf32, #tpu.memory_space<vmem>>, vector<1x128xf32>
      %354 = vector.broadcast %353 : vector<1x128xf32> to vector<8x128xf32>
      %355 = arith.addf %352, %354 : vector<8x128xf32>
      %cst_92 = arith.constant dense<0xFF800000> : vector<8xf32>
      %356 = vector.multi_reduction <maximumf>, %355, %cst_92 [1] : vector<8x128xf32> to vector<8xf32>
      %357 = vector.shape_cast %356 : vector<8xf32> to vector<8x1xf32>
      %358 = vector.broadcast %357 : vector<8x1xf32> to vector<8x128xf32>
      %359 = arith.cmpf oeq, %355, %358 : vector<8x128xf32>
      %c128_i32 = arith.constant 128 : i32
      %360 = vector.broadcast %c128_i32 : i32 to vector<8x128xi32>
      %361 = arith.select %359, %174, %360 : vector<8x128xi1>, vector<8x128xi32>
      %cst_93 = arith.constant dense<2147483647> : vector<8xi32>
      %362 = vector.multi_reduction <minsi>, %361, %cst_93 [1] : vector<8x128xi32> to vector<8xi32>
      %363 = vector.shape_cast %362 : vector<8xi32> to vector<8x1xi32>
      %364 = vector.broadcast %363 : vector<8x1xi32> to vector<8x128xi32>
      %365 = arith.cmpi eq, %174, %364 : vector<8x128xi32>
      %366 = arith.extui %365 : vector<8x128xi1> to vector<8x128xi32>
      %367 = arith.sitofp %366 : vector<8x128xi32> to vector<8x128xf32>
      %cst_94 = arith.constant dense<0.000000e+00> : vector<8x128xf32>
      %368 = tpu.matmul %367, %172, %cst_94 {dimension_numbers = #tpu.dot_dimension_numbers<[1], [0], [0], [1], [0, 0, 1, 1], [], []>} : vector<8x128xf32>, vector<128x128xf32>, vector<8x128xf32> -> vector<8x128xf32>
      scf.yield %368 : vector<8x128xf32>
    }
    %320 = arith.truncf %313 : vector<8x32xf32> to vector<8x32xbf16>
    %cst_70 = arith.constant dense<0.000000e+00> : vector<8x128xf32>
    %321 = tpu.matmul %320, %173, %cst_70 {dimension_numbers = #tpu.dot_dimension_numbers<[1], [0], [0], [1], [0, 0, 1, 1], [], []>} : vector<8x32xbf16>, vector<32x128xbf16>, vector<8x128xf32> -> vector<8x128xf32>
    %322 = arith.addf %319, %321 : vector<8x128xf32>
    %323 = arith.negf %322 : vector<8x128xf32>
    %324 = math.exp %323 : vector<8x128xf32>
    %cst_71 = arith.constant 1.000000e+00 : f32
    %325 = vector.broadcast %cst_71 : f32 to vector<8x128xf32>
    %326 = arith.addf %325, %324 : vector<8x128xf32>
    %327 = arith.divf %325, %326 : vector<8x128xf32>
    %328 = math.tanh %322 : vector<8x128xf32>
    %329 = vector.extract_strided_slice %327 {offsets = [0, 0], sizes = [8, 32], strides = [1, 1]} : vector<8x128xf32> to vector<8x32xf32>
    %330 = vector.extract_strided_slice %327 {offsets = [0, 32], sizes = [8, 32], strides = [1, 1]} : vector<8x128xf32> to vector<8x32xf32>
    %331 = vector.extract_strided_slice %327 {offsets = [0, 64], sizes = [8, 32], strides = [1, 1]} : vector<8x128xf32> to vector<8x32xf32>
    %332 = vector.extract_strided_slice %328 {offsets = [0, 96], sizes = [8, 32], strides = [1, 1]} : vector<8x128xf32> to vector<8x32xf32>
    %333 = arith.mulf %330, %311 : vector<8x32xf32>
    %334 = arith.mulf %329, %332 : vector<8x32xf32>
    %335 = arith.addf %333, %334 : vector<8x32xf32>
    %336 = math.tanh %335 : vector<8x32xf32>
    %337 = arith.mulf %331, %336 : vector<8x32xf32>
    %c48 = arith.constant 48 : index
    %c0_72 = arith.constant 0 : index
    %338 = vector.load %arg13[%c48, %c0_72] : memref<56x32xf32, #tpu.memory_space<vmem>>, vector<8x32xf32>
    tpu.vector_store %arg13[%c48, %c0_72], %337 {strides = array<i32>} : memref<56x32xf32, #tpu.memory_space<vmem>>, vector<8x32xf32>,
    %c0_73 = arith.constant 0 : index
    %c0_74 = arith.constant 0 : index
    %339 = vector.load %arg13[%c0_73, %c0_74] : memref<56x32xf32, #tpu.memory_space<vmem>>, vector<56x32xf32>
    %c0_75 = arith.constant 0 : index
    %c0_76 = arith.constant 0 : index
    %340 = vector.load %arg10[%c0_75, %c0_76] : memref<32x128xf32, #tpu.memory_space<vmem>>, vector<32x128xf32>
    %cst_77 = arith.constant dense<0.000000e+00> : vector<56x128xf32>
    %341 = tpu.matmul %339, %340, %cst_77 {dimension_numbers = #tpu.dot_dimension_numbers<[1], [0], [0], [1], [0, 0, 1, 1], [], []>} : vector<56x32xf32>, vector<32x128xf32>, vector<56x128xf32> -> vector<56x128xf32>
    %c0_78 = arith.constant 0 : index
    %c0_79 = arith.constant 0 : index
    %342 = vector.load %arg11[%c0_78, %c0_79] : memref<1x128xf32, #tpu.memory_space<vmem>>, vector<1x128xf32>
    %343 = vector.broadcast %342 : vector<1x128xf32> to vector<56x128xf32>
    %344 = arith.addf %341, %343 : vector<56x128xf32>
    %cst_80 = arith.constant 0.000000e+00 : f32
    %345 = vector.broadcast %cst_80 : f32 to vector<8x128xf32>
    %c0_81 = arith.constant 0 : index
    %c0_82 = arith.constant 0 : index
    %c0_83 = arith.constant 0 : index
    %346 = vector.load %arg12[%c0_81, %c0_82, %c0_83] : memref<8x8x128xf32, #tpu.memory_space<vmem>>, vector<1x8x128xf32>
    %347 = vector.shape_cast %346 : vector<1x8x128xf32> to vector<8x128xf32>
    %348 = vector.shape_cast %345 : vector<8x128xf32> to vector<1x8x128xf32>
    tpu.vector_store %arg12[%c0_81, %c0_82, %c0_83], %348 {strides = array<i32>} : memref<8x8x128xf32, #tpu.memory_space<vmem>>, vector<1x8x128xf32>,
    %349 = vector.shape_cast %344 : vector<56x128xf32> to vector<7x8x128xf32>
    %c1_84 = arith.constant 1 : index
    %c0_85 = arith.constant 0 : index
    %c0_86 = arith.constant 0 : index
    %350 = vector.load %arg12[%c1_84, %c0_85, %c0_86] : memref<8x8x128xf32, #tpu.memory_space<vmem>>, vector<7x8x128xf32>
    tpu.vector_store %arg12[%c1_84, %c0_85, %c0_86], %349 {strides = array<i32>} : memref<8x8x128xf32, #tpu.memory_space<vmem>>, vector<7x8x128xf32>,
    return
  }
}

</mosaic_0001>

<llo_original>
// kernel: seq2seq_forward.1
$region0: #{seq2seq_forward.1}
  #allocation0 [shape = 'u32[]', space=smem, size = 0x4, offset = 0x4, fixed_abs, tag = 'smem constant byte address 0x4 - core index']
  #allocation1 [shape = 'u32[72,128]{1,0:T(1,128)}', space=vmem, size = 0x9000, scoped, tag = 'internal scratch']
  #allocation2 [shape = 'f32[56,32]{1,0:T(8,128)}', space=vmem, size = 0x7000, scoped, tag = 'scratch operand']
  %s0 = inlined_call_operand.vmem [shape: s32[8], index: 0, kind: input, shape index: {}]
  %s1 = inlined_call_operand.vmem [shape: f32[64,32], index: 1, kind: input, shape index: {}]
  %s2 = inlined_call_operand.vmem [shape: f32[64,32], index: 2, kind: input, shape index: {}]
  %s3 = inlined_call_operand.vmem [shape: f32[128,32], index: 3, kind: input, shape index: {}]
  %s4 = inlined_call_operand.vmem [shape: f32[32,128], index: 4, kind: input, shape index: {}]
  %s5 = inlined_call_operand.vmem [shape: bf16[32,128], index: 5, kind: input, shape index: {}]
  %s6 = inlined_call_operand.vmem [shape: f32[1,128], index: 6, kind: input, shape index: {}]
  %s7 = inlined_call_operand.vmem [shape: f32[32,128], index: 7, kind: input, shape index: {}]
  %s8 = inlined_call_operand.vmem [shape: bf16[32,128], index: 8, kind: input, shape index: {}]
  %s9 = inlined_call_operand.vmem [shape: f32[1,128], index: 9, kind: input, shape index: {}]
  %s10 = inlined_call_operand.vmem [shape: f32[32,128], index: 10, kind: input, shape index: {}]
  %s11 = inlined_call_operand.vmem [shape: f32[1,128], index: 11, kind: input, shape index: {}]
  %s12 = inlined_call_operand.vmem [shape: f32[8,8,128], index: 12, kind: output, shape index: {}]
  %s13 = sld [smem:[#allocation0]]
  $region110: #{seq2seq_forward.1} parent=0
    _
  %s15 = ssub.s32 1, %s13
  %s16 = scalar_select 0, %s15, %s13
  $region1: #{seq2seq_forward.1} parent=0
    #allocation3 [shape = 'u8[512]{0}', space=smem, size = 0x200, scoped, tag = 'input window, operand 0, single buffered']
    #allocation4 [shape = 's32[1]{0}', space=sflag, size = 0x4, scoped, tag = 'scoped memory for seq2seq_forward.1']
    %17 = vsyncpa [#allocation4], 0
    // Predicated region
    $region2: #{seq2seq_forward.1} parent=1 // pred_check
      _
    $region3: #{seq2seq_forward.1} parent=1 // pred_check_branch
      %19 = sbr.rel (0) target = $region5
    $region4: #{seq2seq_forward.1} parent=1 // pred_region
      %21 = vsyncadd [#allocation4], 0
      %s23 = sshll.u32 %s0, 4
      %s24 = int_to_ptr.vmem [resolvable:$true] %s23
      %26 = dma.vmem_to_smem %s24, 16, [#allocation3], [#allocation4]
    $region5: #{seq2seq_forward.1} parent=1 // pred_fallthru
      _
    // Predicated region
    $region6: #{seq2seq_forward.1} parent=1 // pred_check
      _
    $region7: #{seq2seq_forward.1} parent=1 // pred_check_branch
      %28 = sbr.rel (0) target = $region9
    $region8: #{seq2seq_forward.1} parent=1 // pred_region
      _
    $region9: #{seq2seq_forward.1} parent=1 // pred_fallthru
      _
    // Predicated region
    $region10: #{seq2seq_forward.1} parent=1 // pred_check
      _
    $region11: #{seq2seq_forward.1} parent=1 // pred_check_branch
      %30 = sbr.rel (0) target = $region13
    $region12: #{seq2seq_forward.1} parent=1 // pred_region
      _
    $region13: #{seq2seq_forward.1} parent=1 // pred_fallthru
      _
    // Predicated region
    $region14: #{seq2seq_forward.1} parent=1 // pred_check
      _
    $region15: #{seq2seq_forward.1} parent=1 // pred_check_branch
      %32 = sbr.rel (0) target = $region17
    $region16: #{seq2seq_forward.1} parent=1 // pred_region
      _
    $region17: #{seq2seq_forward.1} parent=1 // pred_fallthru
      _
    // Predicated region
    $region18: #{seq2seq_forward.1} parent=1 // pred_check
      _
    $region19: #{seq2seq_forward.1} parent=1 // pred_check_branch
      %34 = sbr.rel (0) target = $region21
    $region20: #{seq2seq_forward.1} parent=1 // pred_region
      _
    $region21: #{seq2seq_forward.1} parent=1 // pred_fallthru
      _
    // Predicated region
    $region22: #{seq2seq_forward.1} parent=1 // pred_check
      _
    $region23: #{seq2seq_forward.1} parent=1 // pred_check_branch
      %36 = sbr.rel (0) target = $region25
    $region24: #{seq2seq_forward.1} parent=1 // pred_region
      _
    $region25: #{seq2seq_forward.1} parent=1 // pred_fallthru
      _
    // Predicated region
    $region26: #{seq2seq_forward.1} parent=1 // pred_check
      _
    $region27: #{seq2seq_forward.1} parent=1 // pred_check_branch
      %38 = sbr.rel (0) target = $region29
    $region28: #{seq2seq_forward.1} parent=1 // pred_region
      _
    $region29: #{seq2seq_forward.1} parent=1 // pred_fallthru
      _
    // Predicated region
    $region30: #{seq2seq_forward.1} parent=1 // pred_check
      _
    $region31: #{seq2seq_forward.1} parent=1 // pred_check_branch
      %40 = sbr.rel (0) target = $region33
    $region32: #{seq2seq_forward.1} parent=1 // pred_region
      _
    $region33: #{seq2seq_forward.1} parent=1 // pred_fallthru
      _
    // Predicated region
    $region34: #{seq2seq_forward.1} parent=1 // pred_check
      _
    $region35: #{seq2seq_forward.1} parent=1 // pred_check_branch
      %42 = sbr.rel (0) target = $region37
    $region36: #{seq2seq_forward.1} parent=1 // pred_region
      _
    $region37: #{seq2seq_forward.1} parent=1 // pred_fallthru
      _
    // Predicated region
    $region38: #{seq2seq_forward.1} parent=1 // pred_check
      _
    $region39: #{seq2seq_forward.1} parent=1 // pred_check_branch
      %44 = sbr.rel (0) target = $region41
    $region40: #{seq2seq_forward.1} parent=1 // pred_region
      _
    $region41: #{seq2seq_forward.1} parent=1 // pred_fallthru
      _
    // Predicated region
    $region42: #{seq2seq_forward.1} parent=1 // pred_check
      _
    $region43: #{seq2seq_forward.1} parent=1 // pred_check_branch
      %46 = sbr.rel (0) target = $region45
    $region44: #{seq2seq_forward.1} parent=1 // pred_region
      _
    $region45: #{seq2seq_forward.1} parent=1 // pred_fallthru
      _
    // Predicated region
    $region46: #{seq2seq_forward.1} parent=1 // pred_check
      _
    $region47: #{seq2seq_forward.1} parent=1 // pred_check_branch
      %48 = sbr.rel (0) target = $region49
    $region48: #{seq2seq_forward.1} parent=1 // pred_region
      _
    $region49: #{seq2seq_forward.1} parent=1 // pred_fallthru
      _
    // Predicated region
    $region50: #{seq2seq_forward.1} parent=1 // pred_check
      _
    $region51: #{seq2seq_forward.1} parent=1 // pred_check_branch
      %50 = sbr.rel (0) target = $region53
    $region52: #{seq2seq_forward.1} parent=1 // pred_region
      %52 = dma.done [#allocation4], 16
    $region53: #{seq2seq_forward.1} parent=1 // pred_fallthru
      _
    %53 = sfence
    %v55 = vld [vmem:[%s1] sm:$0xff]
    %v56 = vld [vmem:[%s1 + $0x8] sm:$0xff]
    %v57 = vld [vmem:[%s1 + $0x10] sm:$0xff]
    %v58 = vld [vmem:[%s1 + $0x18] sm:$0xff]
    %v59 = vld [vmem:[%s1 + $0x20] sm:$0xff]
    %v60 = vld [vmem:[%s1 + $0x28] sm:$0xff]
    %v61 = vld [vmem:[%s1 + $0x30] sm:$0xff]
    %v62 = vld [vmem:[%s1 + $0x38] sm:$0xff]
    %v63 = vld [vmem:[%s4] sm:$0xff]
    %v64 = vld [vmem:[%s4 + $0x8] sm:$0xff]
    %v65 = vld [vmem:[%s4 + $0x10] sm:$0xff]
    %v66 = vld [vmem:[%s4 + $0x18] sm:$0xff]
    %v67 = vld [vmem:[%s6] sm:$0x1]
    %v69 = vperm.slane %v67, 0
    %vm71 = vcmask 261120
    %v73 = vsel %vm71, %v55, 0
    %v76 = vsel %vm71, %v56, 0
    %v79 = vsel %vm71, %v57, 0
    %v82 = vsel %vm71, %v58, 0
    %v85 = vsel %vm71, %v59, 0
    %v88 = vsel %vm71, %v60, 0
    %v91 = vsel %vm71, %v61, 0
    %v94 = vsel %vm71, %v62, 0
    %96 = vmatpush.msra.mxu0 0.0
    %97 = vmatpush.msra.mxu0 0.0
    %98 = vmatpush.msra.mxu0 0.0
    %99 = vmatpush.msra.mxu0 0.0
    %100 = vmatpush.msra.mxu0 0.0
    %101 = vmatpush.msra.mxu0 0.0
    %102 = vmatpush.msra.mxu0 0.0
    %103 = vmatpush.msra.mxu0 0.0
    %104 = vmatpush.msra.mxu0 0.0
    %105 = vmatpush.msra.mxu0 0.0
    %106 = vmatpush.msra.mxu0 0.0
    %107 = vmatpush.msra.mxu0 0.0
    %108 = vmatpush.msra.mxu0 %v66
    %109 = vmatpush.msra.mxu0 %v65
    %110 = vmatpush.msra.mxu0 %v64
    %111 = vmatpush.msra.mxu0 %v63
    %112 = vmatmul.f32.gmra.mxu0 %v73
    %v113 = vpop.f32.mrf.mxu0
    %v114 = vadd.f32 %v69, %v113
    %115 = vmatmul.f32.gmra.mxu0 %v76
    %v116 = vpop.f32.mrf.mxu0
    %v117 = vadd.f32 %v69, %v116
    %118 = vmatmul.f32.gmra.mxu0 %v79
    %v119 = vpop.f32.mrf.mxu0
    %v120 = vadd.f32 %v69, %v119
    %121 = vmatmul.f32.gmra.mxu0 %v82
    %v122 = vpop.f32.mrf.mxu0
    %v123 = vadd.f32 %v69, %v122
    %124 = vmatmul.f32.gmra.mxu0 %v85
    %v125 = vpop.f32.mrf.mxu0
    %v126 = vadd.f32 %v69, %v125
    %127 = vmatmul.f32.gmra.mxu0 %v88
    %v128 = vpop.f32.mrf.mxu0
    %v129 = vadd.f32 %v69, %v128
    %130 = vmatmul.f32.gmra.mxu0 %v91
    %v131 = vpop.f32.mrf.mxu0
    %v132 = vadd.f32 %v69, %v131
    %133 = vmatmul.f32.gmra.mxu0 %v94
    %v134 = vpop.f32.mrf.mxu0
    %v135 = vadd.f32 %v69, %v134
    %136 = vdwg.mxu0
    %v137 = vld [vmem:[%s5] sm:$0xf]
    %v138 = vld [vmem:[%s5 + $0x4] sm:$0xf]
    %v139 = vld [vmem:[%s5 + $0x8] sm:$0xf]
    %v140 = vld [vmem:[%s5 + $0xc] sm:$0xf]
    %v145 = vunpack.c.l.b16 %v137
    %v146 = vunpack.c.l.b16 %v138
    %v147 = vunpack.c.l.b16 %v139
    %v148 = vunpack.c.l.b16 %v140
    %v149 = vpack.c.b16 %v146, %v145
    %v150 = vpack.c.b16 %v148, %v147
    %v154 = vsel %vm71, 0, 0
    %156 = vmatpush.bf16.msra.mxu0 0
    %157 = vmatpush.bf16.msra.mxu0 0
    %158 = vmatpush.bf16.msra.mxu0 0
    %159 = vmatpush.bf16.msra.mxu0 0
    %160 = vmatpush.bf16.msra.mxu0 0
    %161 = vmatpush.bf16.msra.mxu0 0
    %162 = vmatpush.bf16.msra.mxu0 %v150
    %163 = vmatpush.bf16.msra.mxu0 %v149
    %164 = vmatmul.bf16.gmra.mxu0 %v154
    %v165 = vpop.f32.mrf.mxu0
    %v166 = vadd.f32 0.0, %v165
    %v167 = vpop.f32.mrf.mxu0
    %168 = vdwg.mxu0
    %v169 = vadd.f32 %v114, %v166
    %v170 = vxor.u32 %v169, 2147483648
    %v171 = vmul.f32 %v170, 1.442695
    %v172 = vpow.pop %v171
    %v173 = vadd.f32 %v172, 1.0
    %v174 = vrcp.pop %v173
    %v175 = vmul.f32 %v173, %v174
    %v176 = vsub.f32 1.0, %v175
    %v177 = vmul.f32 %v174, %v176
    %v178 = vadd.f32 %v174, %v177
    %vm179 = vweird.f32 %v173
    %vm180 = vweird.f32 %v174
    %vm181 = vmor %vm179, %vm180
    %v182 = vsel %vm181, %v174, %v178
    %v183 = vand.u32 2147483647, %v173
    %vm184 = vcmp.eq.f32.partialorder %v183, 8.507059e+37
    %v185 = vand.u32 %v173, 2147483648
    %v186 = vor.u32 1.1754944e-38, %v185
    %v187 = vsel %vm184, %v186, %v182
    %v188 = vmul.f32 1.0, %v187
    %v189 = vtanh.pop %v169
    %v190 = vmul.f32 %v188, 0.0
    %192 = vrot.lane.b32.xlu0 %v189, 32
    %v193 = vpop.permute.xlu0 %192
    %v195 = vmul.f32 %v188, %v193
    %197 = vrot.lane.b32.xlu0 %v195, 32
    %v198 = vpop.permute.xlu0 %197
    %v200 = vadd.f32 %v190, %v198
    %v201 = vtanh.pop %v200
    %203 = vrot.lane.b32.xlu0 %v201, 32
    %v204 = vpop.permute.xlu0 %203
    %v206 = vmul.f32 %v188, %v204
    %v207 = vpack.c.bf16 %v206, %v206
    %209 = vrot.lane.b32.xlu0 %v207, 64
    %v210 = vpop.permute.xlu0 %209
    %v212 = vsel %vm71, %v210, 0
    %214 = vmatpush.bf16.msra.mxu0 0
    %215 = vmatpush.bf16.msra.mxu0 0
    %216 = vmatpush.bf16.msra.mxu0 0
    %217 = vmatpush.bf16.msra.mxu0 0
    %218 = vmatpush.bf16.msra.mxu0 0
    %219 = vmatpush.bf16.msra.mxu0 0
    %220 = vmatpush.bf16.msra.mxu0 %v150
    %221 = vmatpush.bf16.msra.mxu0 %v149
    %222 = vmatmul.bf16.gmra.mxu0 %v212
    %v223 = vpop.f32.mrf.mxu0
    %v224 = vadd.f32 0.0, %v223
    %v225 = vpop.f32.mrf.mxu0
    %226 = vdwg.mxu0
    %v227 = vadd.f32 %v117, %v224
    %v228 = vxor.u32 %v227, 2147483648
    %v229 = vmul.f32 %v228, 1.442695
    %v230 = vpow.pop %v229
    %v231 = vadd.f32 %v230, 1.0
    %v232 = vrcp.pop %v231
    %v233 = vmul.f32 %v231, %v232
    %v234 = vsub.f32 1.0, %v233
    %v235 = vmul.f32 %v232, %v234
    %v236 = vadd.f32 %v232, %v235
    %vm237 = vweird.f32 %v231
    %vm238 = vweird.f32 %v232
    %vm239 = vmor %vm237, %vm238
    %v240 = vsel %vm239, %v232, %v236
    %v241 = vand.u32 2147483647, %v231
    %vm242 = vcmp.eq.f32.partialorder %v241, 8.507059e+37
    %v243 = vand.u32 %v231, 2147483648
    %v244 = vor.u32 1.1754944e-38, %v243
    %v245 = vsel %vm242, %v244, %v240
    %v246 = vmul.f32 1.0, %v245
    %v247 = vtanh.pop %v227
    %v248 = vmul.f32 %v246, %v200
    %250 = vrot.lane.b32.xlu0 %v247, 32
    %v251 = vpop.permute.xlu0 %250
    %v253 = vmul.f32 %v246, %v251
    %255 = vrot.lane.b32.xlu0 %v253, 32
    %v256 = vpop.permute.xlu0 %255
    %v258 = vadd.f32 %v248, %v256
    %v259 = vtanh.pop %v258
    %261 = vrot.lane.b32.xlu0 %v259, 32
    %v262 = vpop.permute.xlu0 %261
    %v264 = vmul.f32 %v246, %v262
    %v265 = vpack.c.bf16 %v264, %v264
    %267 = vrot.lane.b32.xlu0 %v265, 64
    %v268 = vpop.permute.xlu0 %267
    %v270 = vsel %vm71, %v268, 0
    %272 = vmatpush.bf16.msra.mxu0 0
    %273 = vmatpush.bf16.msra.mxu0 0
    %274 = vmatpush.bf16.msra.mxu0 0
    %275 = vmatpush.bf16.msra.mxu0 0
    %276 = vmatpush.bf16.msra.mxu0 0
    %277 = vmatpush.bf16.msra.mxu0 0
    %278 = vmatpush.bf16.msra.mxu0 %v150
    %279 = vmatpush.bf16.msra.mxu0 %v149
    %280 = vmatmul.bf16.gmra.mxu0 %v270
    %v281 = vpop.f32.mrf.mxu0
    %v282 = vadd.f32 0.0, %v281
    %v283 = vpop.f32.mrf.mxu0
    %284 = vdwg.mxu0
    %v285 = vadd.f32 %v120, %v282
    %v286 = vxor.u32 %v285, 2147483648
    %v287 = vmul.f32 %v286, 1.442695
    %v288 = vpow.pop %v287
    %v289 = vadd.f32 %v288, 1.0
    %v290 = vrcp.pop %v289
    %v291 = vmul.f32 %v289, %v290
    %v292 = vsub.f32 1.0, %v291
    %v293 = vmul.f32 %v290, %v292
    %v294 = vadd.f32 %v290, %v293
    %vm295 = vweird.f32 %v289
    %vm296 = vweird.f32 %v290
    %vm297 = vmor %vm295, %vm296
    %v298 = vsel %vm297, %v290, %v294
    %v299 = vand.u32 2147483647, %v289
    %vm300 = vcmp.eq.f32.partialorder %v299, 8.507059e+37
    %v301 = vand.u32 %v289, 2147483648
    %v302 = vor.u32 1.1754944e-38, %v301
    %v303 = vsel %vm300, %v302, %v298
    %v304 = vmul.f32 1.0, %v303
    %v305 = vtanh.pop %v285
    %v306 = vmul.f32 %v304, %v258
    %308 = vrot.lane.b32.xlu0 %v305, 32
    %v309 = vpop.permute.xlu0 %308
    %v311 = vmul.f32 %v304, %v309
    %313 = vrot.lane.b32.xlu0 %v311, 32
    %v314 = vpop.permute.xlu0 %313
    %v316 = vadd.f32 %v306, %v314
    %v317 = vtanh.pop %v316
    %319 = vrot.lane.b32.xlu0 %v317, 32
    %v320 = vpop.permute.xlu0 %319
    %v322 = vmul.f32 %v304, %v320
    %v323 = vpack.c.bf16 %v322, %v322
    %325 = vrot.lane.b32.xlu0 %v323, 64
    %v326 = vpop.permute.xlu0 %325
    %v328 = vsel %vm71, %v326, 0
    %330 = vmatpush.bf16.msra.mxu0 0
    %331 = vmatpush.bf16.msra.mxu0 0
    %332 = vmatpush.bf16.msra.mxu0 0
    %333 = vmatpush.bf16.msra.mxu0 0
    %334 = vmatpush.bf16.msra.mxu0 0
    %335 = vmatpush.bf16.msra.mxu0 0
    %336 = vmatpush.bf16.msra.mxu0 %v150
    %337 = vmatpush.bf16.msra.mxu0 %v149
    %338 = vmatmul.bf16.gmra.mxu0 %v328
    %v339 = vpop.f32.mrf.mxu0
    %v340 = vadd.f32 0.0, %v339
    %v341 = vpop.f32.mrf.mxu0
    %342 = vdwg.mxu0
    %v343 = vadd.f32 %v123, %v340
    %v344 = vxor.u32 %v343, 2147483648
    %v345 = vmul.f32 %v344, 1.442695
    %v346 = vpow.pop %v345
    %v347 = vadd.f32 %v346, 1.0
    %v348 = vrcp.pop %v347
    %v349 = vmul.f32 %v347, %v348
    %v350 = vsub.f32 1.0, %v349
    %v351 = vmul.f32 %v348, %v350
    %v352 = vadd.f32 %v348, %v351
    %vm353 = vweird.f32 %v347
    %vm354 = vweird.f32 %v348
    %vm355 = vmor %vm353, %vm354
    %v356 = vsel %vm355, %v348, %v352
    %v357 = vand.u32 2147483647, %v347
    %vm358 = vcmp.eq.f32.partialorder %v357, 8.507059e+37
    %v359 = vand.u32 %v347, 2147483648
    %v360 = vor.u32 1.1754944e-38, %v359
    %v361 = vsel %vm358, %v360, %v356
    %v362 = vmul.f32 1.0, %v361
    %v363 = vtanh.pop %v343
    %v364 = vmul.f32 %v362, %v316
    %366 = vrot.lane.b32.xlu0 %v363, 32
    %v367 = vpop.permute.xlu0 %366
    %v369 = vmul.f32 %v362, %v367
    %371 = vrot.lane.b32.xlu0 %v369, 32
    %v372 = vpop.permute.xlu0 %371
    %v374 = vadd.f32 %v364, %v372
    %v375 = vtanh.pop %v374
    %377 = vrot.lane.b32.xlu0 %v375, 32
    %v378 = vpop.permute.xlu0 %377
    %v380 = vmul.f32 %v362, %v378
    %v381 = vpack.c.bf16 %v380, %v380
    %383 = vrot.lane.b32.xlu0 %v381, 64
    %v384 = vpop.permute.xlu0 %383
    %v386 = vsel %vm71, %v384, 0
    %388 = vmatpush.bf16.msra.mxu0 0
    %389 = vmatpush.bf16.msra.mxu0 0
    %390 = vmatpush.bf16.msra.mxu0 0
    %391 = vmatpush.bf16.msra.mxu0 0
    %392 = vmatpush.bf16.msra.mxu0 0
    %393 = vmatpush.bf16.msra.mxu0 0
    %394 = vmatpush.bf16.msra.mxu0 %v150
    %395 = vmatpush.bf16.msra.mxu0 %v149
    %396 = vmatmul.bf16.gmra.mxu0 %v386
    %v397 = vpop.f32.mrf.mxu0
    %v398 = vadd.f32 0.0, %v397
    %v399 = vpop.f32.mrf.mxu0
    %400 = vdwg.mxu0
    %v401 = vadd.f32 %v126, %v398
    %v402 = vxor.u32 %v401, 2147483648
    %v403 = vmul.f32 %v402, 1.442695
    %v404 = vpow.pop %v403
    %v405 = vadd.f32 %v404, 1.0
    %v406 = vrcp.pop %v405
    %v407 = vmul.f32 %v405, %v406
    %v408 = vsub.f32 1.0, %v407
    %v409 = vmul.f32 %v406, %v408
    %v410 = vadd.f32 %v406, %v409
    %vm411 = vweird.f32 %v405
    %vm412 = vweird.f32 %v406
    %vm413 = vmor %vm411, %vm412
    %v414 = vsel %vm413, %v406, %v410
    %v415 = vand.u32 2147483647, %v405
    %vm416 = vcmp.eq.f32.partialorder %v415, 8.507059e+37
    %v417 = vand.u32 %v405, 2147483648
    %v418 = vor.u32 1.1754944e-38, %v417
    %v419 = vsel %vm416, %v418, %v414
    %v420 = vmul.f32 1.0, %v419
    %v421 = vtanh.pop %v401
    %v422 = vmul.f32 %v420, %v374
    %424 = vrot.lane.b32.xlu0 %v421, 32
    %v425 = vpop.permute.xlu0 %424
    %v427 = vmul.f32 %v420, %v425
    %429 = vrot.lane.b32.xlu0 %v427, 32
    %v430 = vpop.permute.xlu0 %429
    %v432 = vadd.f32 %v422, %v430
    %v433 = vtanh.pop %v432
    %435 = vrot.lane.b32.xlu0 %v433, 32
    %v436 = vpop.permute.xlu0 %435
    %v438 = vmul.f32 %v420, %v436
    %v439 = vpack.c.bf16 %v438, %v438
    %441 = vrot.lane.b32.xlu0 %v439, 64
    %v442 = vpop.permute.xlu0 %441
    %v444 = vsel %vm71, %v442, 0
    %446 = vmatpush.bf16.msra.mxu0 0
    %447 = vmatpush.bf16.msra.mxu0 0
    %448 = vmatpush.bf16.msra.mxu0 0
    %449 = vmatpush.bf16.msra.mxu0 0
    %450 = vmatpush.bf16.msra.mxu0 0
    %451 = vmatpush.bf16.msra.mxu0 0
    %452 = vmatpush.bf16.msra.mxu0 %v150
    %453 = vmatpush.bf16.msra.mxu0 %v149
    %454 = vmatmul.bf16.gmra.mxu0 %v444
    %v455 = vpop.f32.mrf.mxu0
    %v456 = vadd.f32 0.0, %v455
    %v457 = vpop.f32.mrf.mxu0
    %458 = vdwg.mxu0
    %v459 = vadd.f32 %v129, %v456
    %v460 = vxor.u32 %v459, 2147483648
    %v461 = vmul.f32 %v460, 1.442695
    %v462 = vpow.pop %v461
    %v463 = vadd.f32 %v462, 1.0
    %v464 = vrcp.pop %v463
    %v465 = vmul.f32 %v463, %v464
    %v466 = vsub.f32 1.0, %v465
    %v467 = vmul.f32 %v464, %v466
    %v468 = vadd.f32 %v464, %v467
    %vm469 = vweird.f32 %v463
    %vm470 = vweird.f32 %v464
    %vm471 = vmor %vm469, %vm470
    %v472 = vsel %vm471, %v464, %v468
    %v473 = vand.u32 2147483647, %v463
    %vm474 = vcmp.eq.f32.partialorder %v473, 8.507059e+37
    %v475 = vand.u32 %v463, 2147483648
    %v476 = vor.u32 1.1754944e-38, %v475
    %v477 = vsel %vm474, %v476, %v472
    %v478 = vmul.f32 1.0, %v477
    %v479 = vtanh.pop %v459
    %v480 = vmul.f32 %v478, %v432
    %482 = vrot.lane.b32.xlu0 %v479, 32
    %v483 = vpop.permute.xlu0 %482
    %v485 = vmul.f32 %v478, %v483
    %487 = vrot.lane.b32.xlu0 %v485, 32
    %v488 = vpop.permute.xlu0 %487
    %v490 = vadd.f32 %v480, %v488
    %v491 = vtanh.pop %v490
    %493 = vrot.lane.b32.xlu0 %v491, 32
    %v494 = vpop.permute.xlu0 %493
    %v496 = vmul.f32 %v478, %v494
    %v497 = vpack.c.bf16 %v496, %v496
    %499 = vrot.lane.b32.xlu0 %v497, 64
    %v500 = vpop.permute.xlu0 %499
    %v502 = vsel %vm71, %v500, 0
    %504 = vmatpush.bf16.msra.mxu0 0
    %505 = vmatpush.bf16.msra.mxu0 0
    %506 = vmatpush.bf16.msra.mxu0 0
    %507 = vmatpush.bf16.msra.mxu0 0
    %508 = vmatpush.bf16.msra.mxu0 0
    %509 = vmatpush.bf16.msra.mxu0 0
    %510 = vmatpush.bf16.msra.mxu0 %v150
    %511 = vmatpush.bf16.msra.mxu0 %v149
    %512 = vmatmul.bf16.gmra.mxu0 %v502
    %v513 = vpop.f32.mrf.mxu0
    %v514 = vadd.f32 0.0, %v513
    %v515 = vpop.f32.mrf.mxu0
    %516 = vdwg.mxu0
    %v517 = vadd.f32 %v132, %v514
    %v518 = vxor.u32 %v517, 2147483648
    %v519 = vmul.f32 %v518, 1.442695
    %v520 = vpow.pop %v519
    %v521 = vadd.f32 %v520, 1.0
    %v522 = vrcp.pop %v521
    %v523 = vmul.f32 %v521, %v522
    %v524 = vsub.f32 1.0, %v523
    %v525 = vmul.f32 %v522, %v524
    %v526 = vadd.f32 %v522, %v525
    %vm527 = vweird.f32 %v521
    %vm528 = vweird.f32 %v522
    %vm529 = vmor %vm527, %vm528
    %v530 = vsel %vm529, %v522, %v526
    %v531 = vand.u32 2147483647, %v521
    %vm532 = vcmp.eq.f32.partialorder %v531, 8.507059e+37
    %v533 = vand.u32 %v521, 2147483648
    %v534 = vor.u32 1.1754944e-38, %v533
    %v535 = vsel %vm532, %v534, %v530
    %v536 = vmul.f32 1.0, %v535
    %v537 = vtanh.pop %v517
    %v538 = vmul.f32 %v536, %v490
    %540 = vrot.lane.b32.xlu0 %v537, 32
    %v541 = vpop.permute.xlu0 %540
    %v543 = vmul.f32 %v536, %v541
    %545 = vrot.lane.b32.xlu0 %v543, 32
    %v546 = vpop.permute.xlu0 %545
    %v548 = vadd.f32 %v538, %v546
    %v549 = vtanh.pop %v548
    %551 = vrot.lane.b32.xlu0 %v549, 32
    %v552 = vpop.permute.xlu0 %551
    %v554 = vmul.f32 %v536, %v552
    %v555 = vpack.c.bf16 %v554, %v554
    %557 = vrot.lane.b32.xlu0 %v555, 64
    %v558 = vpop.permute.xlu0 %557
    %v560 = vsel %vm71, %v558, 0
    %562 = vmatpush.bf16.msra.mxu0 0
    %563 = vmatpush.bf16.msra.mxu0 0
    %564 = vmatpush.bf16.msra.mxu0 0
    %565 = vmatpush.bf16.msra.mxu0 0
    %566 = vmatpush.bf16.msra.mxu0 0
    %567 = vmatpush.bf16.msra.mxu0 0
    %568 = vmatpush.bf16.msra.mxu0 %v150
    %569 = vmatpush.bf16.msra.mxu0 %v149
    %570 = vmatmul.bf16.gmra.mxu0 %v560
    %v571 = vpop.f32.mrf.mxu0
    %v572 = vadd.f32 0.0, %v571
    %v573 = vpop.f32.mrf.mxu0
    %574 = vdwg.mxu0
    %v575 = vadd.f32 %v135, %v572
    %v576 = vxor.u32 %v575, 2147483648
    %v577 = vmul.f32 %v576, 1.442695
    %v578 = vpow.pop %v577
    %v579 = vadd.f32 %v578, 1.0
    %v580 = vrcp.pop %v579
    %v581 = vmul.f32 %v579, %v580
    %v582 = vsub.f32 1.0, %v581
    %v583 = vmul.f32 %v580, %v582
    %v584 = vadd.f32 %v580, %v583
    %vm585 = vweird.f32 %v579
    %vm586 = vweird.f32 %v580
    %vm587 = vmor %vm585, %vm586
    %v588 = vsel %vm587, %v580, %v584
    %v589 = vand.u32 2147483647, %v579
    %vm590 = vcmp.eq.f32.partialorder %v589, 8.507059e+37
    %v591 = vand.u32 %v579, 2147483648
    %v592 = vor.u32 1.1754944e-38, %v591
    %v593 = vsel %vm590, %v592, %v588
    %v594 = vmul.f32 1.0, %v593
    %v595 = vtanh.pop %v575
    %v596 = vmul.f32 %v594, %v548
    %598 = vrot.lane.b32.xlu0 %v595, 32
    %v599 = vpop.permute.xlu0 %598
    %v601 = vmul.f32 %v594, %v599
    %603 = vrot.lane.b32.xlu0 %v601, 32
    %v604 = vpop.permute.xlu0 %603
    %v606 = vadd.f32 %v596, %v604
    %v607 = vtanh.pop %v606
    %609 = vrot.lane.b32.xlu0 %v607, 32
    %v610 = vpop.permute.xlu0 %609
    %v612 = vmul.f32 %v594, %v610
    %v613 = vld [vmem:[%s2] sm:$0xff]
    %v614 = vld [vmem:[%s2 + $0x8] sm:$0xff]
    %v615 = vld [vmem:[%s2 + $0x10] sm:$0xff]
    %v616 = vld [vmem:[%s2 + $0x18] sm:$0xff]
    %v617 = vld [vmem:[%s2 + $0x20] sm:$0xff]
    %v618 = vld [vmem:[%s2 + $0x28] sm:$0xff]
    %v619 = vld [vmem:[%s2 + $0x30] sm:$0xff]
    %v620 = vld [vmem:[%s2 + $0x38] sm:$0xff]
    %v621 = vld [vmem:[%s7] sm:$0xff]
    %v622 = vld [vmem:[%s7 + $0x8] sm:$0xff]
    %v623 = vld [vmem:[%s7 + $0x10] sm:$0xff]
    %v624 = vld [vmem:[%s7 + $0x18] sm:$0xff]
    %v625 = vld [vmem:[%s9] sm:$0x1]
    %v627 = vperm.slane %v625, 0
    %v630 = vsel %vm71, %v613, 0
    %v633 = vsel %vm71, %v614, 0
    %v636 = vsel %vm71, %v615, 0
    %v639 = vsel %vm71, %v616, 0
    %v642 = vsel %vm71, %v617, 0
    %v645 = vsel %vm71, %v618, 0
    %v648 = vsel %vm71, %v619, 0
    %v651 = vsel %vm71, %v620, 0
    %653 = vmatpush.msra.mxu0 0.0
    %654 = vmatpush.msra.mxu0 0.0
    %655 = vmatpush.msra.mxu0 0.0
    %656 = vmatpush.msra.mxu0 0.0
    %657 = vmatpush.msra.mxu0 0.0
    %658 = vmatpush.msra.mxu0 0.0
    %659 = vmatpush.msra.mxu0 0.0
    %660 = vmatpush.msra.mxu0 0.0
    %661 = vmatpush.msra.mxu0 0.0
    %662 = vmatpush.msra.mxu0 0.0
    %663 = vmatpush.msra.mxu0 0.0
    %664 = vmatpush.msra.mxu0 0.0
    %665 = vmatpush.msra.mxu0 %v624
    %666 = vmatpush.msra.mxu0 %v623
    %667 = vmatpush.msra.mxu0 %v622
    %668 = vmatpush.msra.mxu0 %v621
    %669 = vmatmul.f32.gmra.mxu0 %v630
    %v670 = vpop.f32.mrf.mxu0
    %v671 = vadd.f32 %v627, %v670
    %672 = vmatmul.f32.gmra.mxu0 %v633
    %v673 = vpop.f32.mrf.mxu0
    %v674 = vadd.f32 %v627, %v673
    %675 = vmatmul.f32.gmra.mxu0 %v636
    %v676 = vpop.f32.mrf.mxu0
    %v677 = vadd.f32 %v627, %v676
    %678 = vmatmul.f32.gmra.mxu0 %v639
    %v679 = vpop.f32.mrf.mxu0
    %v680 = vadd.f32 %v627, %v679
    %681 = vmatmul.f32.gmra.mxu0 %v642
    %v682 = vpop.f32.mrf.mxu0
    %v683 = vadd.f32 %v627, %v682
    %684 = vmatmul.f32.gmra.mxu0 %v645
    %v685 = vpop.f32.mrf.mxu0
    %v686 = vadd.f32 %v627, %v685
    %687 = vmatmul.f32.gmra.mxu0 %v648
    %v688 = vpop.f32.mrf.mxu0
    %v689 = vadd.f32 %v627, %v688
    %690 = vmatmul.f32.gmra.mxu0 %v651
    %v691 = vpop.f32.mrf.mxu0
    %692 = vdwg.mxu0
    %v693 = vld [vmem:[%s3] sm:$0xff]
    %v694 = vld [vmem:[%s3 + $0x8] sm:$0xff]
    %v695 = vld [vmem:[%s3 + $0x10] sm:$0xff]
    %v696 = vld [vmem:[%s3 + $0x18] sm:$0xff]
    %v697 = vld [vmem:[%s3 + $0x20] sm:$0xff]
    %v698 = vld [vmem:[%s3 + $0x28] sm:$0xff]
    %v699 = vld [vmem:[%s3 + $0x30] sm:$0xff]
    %v700 = vld [vmem:[%s3 + $0x38] sm:$0xff]
    %v701 = vld [vmem:[%s3 + $0x40] sm:$0xff]
    %v702 = vld [vmem:[%s3 + $0x48] sm:$0xff]
    %v703 = vld [vmem:[%s3 + $0x50] sm:$0xff]
    %v704 = vld [vmem:[%s3 + $0x58] sm:$0xff]
    %v705 = vld [vmem:[%s3 + $0x60] sm:$0xff]
    %v706 = vld [vmem:[%s3 + $0x68] sm:$0xff]
    %v707 = vld [vmem:[%s3 + $0x70] sm:$0xff]
    %v708 = vld [vmem:[%s3 + $0x78] sm:$0xff]
    %v710 = vsel %vm71, %v693, 0
    %v713 = vsel %vm71, %v694, 0
    %v716 = vsel %vm71, %v695, 0
    %v719 = vsel %vm71, %v696, 0
    %v722 = vsel %vm71, %v697, 0
    %v725 = vsel %vm71, %v698, 0
    %v728 = vsel %vm71, %v699, 0
    %v731 = vsel %vm71, %v700, 0
    %v734 = vsel %vm71, %v701, 0
    %v737 = vsel %vm71, %v702, 0
    %v740 = vsel %vm71, %v703, 0
    %v743 = vsel %vm71, %v704, 0
    %v746 = vsel %vm71, %v705, 0
    %v749 = vsel %vm71, %v706, 0
    %v752 = vsel %vm71, %v707, 0
    %v755 = vsel %vm71, %v708, 0
    %757 = vmatpush.msra.mxu0 0.0
    %758 = vmatpush.msra.mxu0 0.0
    %759 = vmatpush.msra.mxu0 0.0
    %760 = vmatpush.msra.mxu0 0.0
    %761 = vmatpush.msra.mxu0 0.0
    %762 = vmatpush.msra.mxu0 0.0
    %763 = vmatpush.msra.mxu0 0.0
    %764 = vmatpush.msra.mxu0 0.0
    %765 = vmatpush.msra.mxu0 0.0
    %766 = vmatpush.msra.mxu0 0.0
    %767 = vmatpush.msra.mxu0 0.0
    %768 = vmatpush.msra.mxu0 0.0
    %769 = vmatpush.msra.mxu0 %v624
    %770 = vmatpush.msra.mxu0 %v623
    %771 = vmatpush.msra.mxu0 %v622
    %772 = vmatpush.msra.mxu0 %v621
    %773 = vmatmul.f32.gmra.mxu0 %v710
    %v774 = vpop.f32.mrf.mxu0
    %v775 = vadd.f32 %v627, %v774
    %776 = vmatmul.f32.gmra.mxu0 %v713
    %v777 = vpop.f32.mrf.mxu0
    %v778 = vadd.f32 %v627, %v777
    %779 = vmatmul.f32.gmra.mxu0 %v716
    %v780 = vpop.f32.mrf.mxu0
    %v781 = vadd.f32 %v627, %v780
    %782 = vmatmul.f32.gmra.mxu0 %v719
    %v783 = vpop.f32.mrf.mxu0
    %v784 = vadd.f32 %v627, %v783
    %785 = vmatmul.f32.gmra.mxu0 %v722
    %v786 = vpop.f32.mrf.mxu0
    %v787 = vadd.f32 %v627, %v786
    %788 = vmatmul.f32.gmra.mxu0 %v725
    %v789 = vpop.f32.mrf.mxu0
    %v790 = vadd.f32 %v627, %v789
    %791 = vmatmul.f32.gmra.mxu0 %v728
    %v792 = vpop.f32.mrf.mxu0
    %v793 = vadd.f32 %v627, %v792
    %794 = vmatmul.f32.gmra.mxu0 %v731
    %v795 = vpop.f32.mrf.mxu0
    %v796 = vadd.f32 %v627, %v795
    %797 = vmatmul.f32.gmra.mxu0 %v734
    %v798 = vpop.f32.mrf.mxu0
    %v799 = vadd.f32 %v627, %v798
    %800 = vmatmul.f32.gmra.mxu0 %v737
    %v801 = vpop.f32.mrf.mxu0
    %v802 = vadd.f32 %v627, %v801
    %803 = vmatmul.f32.gmra.mxu0 %v740
    %v804 = vpop.f32.mrf.mxu0
    %v805 = vadd.f32 %v627, %v804
    %806 = vmatmul.f32.gmra.mxu0 %v743
    %v807 = vpop.f32.mrf.mxu0
    %v808 = vadd.f32 %v627, %v807
    %809 = vmatmul.f32.gmra.mxu0 %v746
    %v810 = vpop.f32.mrf.mxu0
    %v811 = vadd.f32 %v627, %v810
    %812 = vmatmul.f32.gmra.mxu0 %v749
    %v813 = vpop.f32.mrf.mxu0
    %v814 = vadd.f32 %v627, %v813
    %815 = vmatmul.f32.gmra.mxu0 %v752
    %v816 = vpop.f32.mrf.mxu0
    %v817 = vadd.f32 %v627, %v816
    %818 = vmatmul.f32.gmra.mxu0 %v755
    %v819 = vpop.f32.mrf.mxu0
    %v820 = vadd.f32 %v627, %v819
    %821 = vdwg.mxu0
    %v822 = vld [vmem:[%s8] sm:$0xf]
    %v823 = vld [vmem:[%s8 + $0x4] sm:$0xf]
    %v824 = vld [vmem:[%s8 + $0x8] sm:$0xf]
    %v825 = vld [vmem:[%s8 + $0xc] sm:$0xf]
    %v826 = vlaneseq
    %v827 = vand.u32 %v826, 127
    %v828 = vpack.c.bf16 %v612, %v612
    %830 = vrot.lane.b32.xlu0 %v828, 64
    %v831 = vpop.permute.xlu0 %830
    %v836 = vunpack.c.l.b16 %v822
    %v837 = vunpack.c.l.b16 %v823
    %v838 = vunpack.c.l.b16 %v824
    %v839 = vunpack.c.l.b16 %v825
    %v840 = vpack.c.b16 %v837, %v836
    %v841 = vpack.c.b16 %v839, %v838
    %v845 = vsel %vm71, %v831, 0
    %847 = vmatpush.bf16.msra.mxu0 0
    %848 = vmatpush.bf16.msra.mxu0 0
    %849 = vmatpush.bf16.msra.mxu0 0
    %850 = vmatpush.bf16.msra.mxu0 0
    %851 = vmatpush.bf16.msra.mxu0 0
    %852 = vmatpush.bf16.msra.mxu0 0
    %853 = vmatpush.bf16.msra.mxu0 %v841
    %854 = vmatpush.bf16.msra.mxu0 %v840
    %855 = vmatmul.bf16.gmra.mxu0 %v845
    %v856 = vpop.f32.mrf.mxu0
    %v857 = vadd.f32 0.0, %v856
    %v858 = vpop.f32.mrf.mxu0
    %859 = vdwg.mxu0
    %v860 = vadd.f32 %v671, %v857
    %v861 = vxor.u32 %v860, 2147483648
    %v862 = vmul.f32 %v861, 1.442695
    %v863 = vpow.pop %v862
    %v864 = vadd.f32 %v863, 1.0
    %v865 = vrcp.pop %v864
    %v866 = vmul.f32 %v864, %v865
    %v867 = vsub.f32 1.0, %v866
    %v868 = vmul.f32 %v865, %v867
    %v869 = vadd.f32 %v865, %v868
    %vm870 = vweird.f32 %v864
    %vm871 = vweird.f32 %v865
    %vm872 = vmor %vm870, %vm871
    %v873 = vsel %vm872, %v865, %v869
    %v874 = vand.u32 2147483647, %v864
    %vm875 = vcmp.eq.f32.partialorder %v874, 8.507059e+37
    %v876 = vand.u32 %v864, 2147483648
    %v877 = vor.u32 1.1754944e-38, %v876
    %v878 = vsel %vm875, %v877, %v873
    %v879 = vmul.f32 1.0, %v878
    %v880 = vtanh.pop %v860
    %v881 = vmul.f32 %v879, %v606
    %883 = vrot.lane.b32.xlu0 %v880, 32
    %v884 = vpop.permute.xlu0 %883
    %v886 = vmul.f32 %v879, %v884
    %888 = vrot.lane.b32.xlu0 %v886, 32
    %v889 = vpop.permute.xlu0 %888
    %v891 = vadd.f32 %v881, %v889
    %v892 = vtanh.pop %v891
    %894 = vrot.lane.b32.xlu0 %v892, 32
    %v895 = vpop.permute.xlu0 %894
    %v897 = vmul.f32 %v879, %v895
    %899 = vrot.lane.b32.xlu0 %v897, 64
    %v900 = vpop.permute.xlu0 %899
    %902 = vst.msk [vmem:[#allocation2] sm:$0xff] %vm71, %v900
    %s903 = sld [smem:[#allocation3 + $0x1]]
    %p904 = scmp.eq.s32.totalorder %s903, 1
    // Predicated region
    $region54: #{seq2seq_forward.1} parent=1 // pred_check
      %p905 = pneg %p904
    $region55: #{seq2seq_forward.1} parent=1 // pred_check_branch
      %907 = sbr.rel (%p905) target = $region57
    $region56: #{seq2seq_forward.1} parent=1 // pred_region
      _
    $region57: #{seq2seq_forward.1} parent=1 // pred_fallthru
      _
    %p908 = pneg %p904
    // Predicated region
    $region58: #{seq2seq_forward.1} parent=1 // pred_check
      _
    $region59: #{seq2seq_forward.1} parent=1 // pred_check_branch
      %910 = sbr.rel (%p904) target = $region61
    $region60: #{seq2seq_forward.1} parent=1 // pred_region
      %v911 = vld [vmem:[%s10] sm:$0xff]
      %v912 = vld [vmem:[%s10 + $0x8] sm:$0xff]
      %v913 = vld [vmem:[%s10 + $0x10] sm:$0xff]
      %v914 = vld [vmem:[%s10 + $0x18] sm:$0xff]
      %v915 = vld [vmem:[%s11] sm:$0x1]
      %v917 = vperm.slane %v915, 0
      %v919 = vsel %vm71, %v900, 0
      %921 = vmatpush.msra.mxu0 0.0
      %922 = vmatpush.msra.mxu0 0.0
      %923 = vmatpush.msra.mxu0 0.0
      %924 = vmatpush.msra.mxu0 0.0
      %925 = vmatpush.msra.mxu0 0.0
      %926 = vmatpush.msra.mxu0 0.0
      %927 = vmatpush.msra.mxu0 0.0
      %928 = vmatpush.msra.mxu0 0.0
      %929 = vmatpush.msra.mxu0 0.0
      %930 = vmatpush.msra.mxu0 0.0
      %931 = vmatpush.msra.mxu0 0.0
      %932 = vmatpush.msra.mxu0 0.0
      %933 = vmatpush.msra.mxu0 %v914
      %934 = vmatpush.msra.mxu0 %v913
      %935 = vmatpush.msra.mxu0 %v912
      %936 = vmatpush.msra.mxu0 %v911
      %937 = vmatmul.f32.gmra.mxu0 %v919
      %v938 = vpop.f32.mrf.mxu0
      %v939 = vadd.f32 %v917, %v938
      %940 = vdwg.mxu0
      %941 = vmax.xlane.f32.xlu0 %v939
      %v942 = vpop.xlane.xlu0 %941
      %vm943 = vcmp.eq.f32.partialorder %v939, %v942
      %v944 = vsel %vm943, %v827, 128
      %v945 = vand.u32 %v944, 65535
      %v946 = vshra.s32 %v944, 16
      %v947 = vcvt.s32.f32 %v945
      %v948 = vcvt.s32.f32 %v946
      %949 = vmin.xlane.f32.xlu0 %v948
      %v950 = vpop.xlane.xlu0 %949
      %vm951 = vcmp.eq.f32.partialorder %v948, %v950
      %v952 = vsel %vm951, %v947, inf
      %953 = vmin.xlane.f32.xlu0 %v952
      %v954 = vpop.xlane.xlu0 %953
      %v955 = vcvt.f32.s32 %v954
      %v956 = vcvt.f32.s32 %v950
      %v957 = vshll.u32 %v956, 16
      %v958 = vadd.s32 %v957, %v955
      %vm959 = vcmp.eq.s32.totalorder %v827, %v958
      %v960 = vsel %vm959, 1, 0
      %v961 = vcvt.s32.f32 %v960
      %962 = vmatpush.msra.mxu0 %v820
      %963 = vmatpush.msra.mxu0 %v817
      %964 = vmatpush.msra.mxu0 %v814
      %965 = vmatpush.msra.mxu0 %v811
      %966 = vmatpush.msra.mxu0 %v808
      %967 = vmatpush.msra.mxu0 %v805
      %968 = vmatpush.msra.mxu0 %v802
      %969 = vmatpush.msra.mxu0 %v799
      %970 = vmatpush.msra.mxu0 %v796
      %971 = vmatpush.msra.mxu0 %v793
      %972 = vmatpush.msra.mxu0 %v790
      %973 = vmatpush.msra.mxu0 %v787
      %974 = vmatpush.msra.mxu0 %v784
      %975 = vmatpush.msra.mxu0 %v781
      %976 = vmatpush.msra.mxu0 %v778
      %977 = vmatpush.msra.mxu0 %v775
      %978 = vmatmul.f32.gmra.mxu0 %v961
      %v979 = vpop.f32.mrf.mxu0
      %v980 = vadd.f32 0.0, %v979
      %981 = vdwg.mxu0
    $region61: #{seq2seq_forward.1} parent=1 // pred_fallthru
      %v982 = vphi %v674, %v980
    %v983 = vpack.c.bf16 %v897, %v897
    %985 = vrot.lane.b32.xlu0 %v983, 64
    %v986 = vpop.permute.xlu0 %985
    %v988 = vsel %vm71, %v986, 0
    %990 = vmatpush.bf16.msra.mxu0 0
    %991 = vmatpush.bf16.msra.mxu0 0
    %992 = vmatpush.bf16.msra.mxu0 0
    %993 = vmatpush.bf16.msra.mxu0 0
    %994 = vmatpush.bf16.msra.mxu0 0
    %995 = vmatpush.bf16.msra.mxu0 0
    %996 = vmatpush.bf16.msra.mxu0 %v841
    %997 = vmatpush.bf16.msra.mxu0 %v840
    %998 = vmatmul.bf16.gmra.mxu0 %v988
    %v999 = vpop.f32.mrf.mxu0
    %v1000 = vadd.f32 0.0, %v999
    %v1001 = vpop.f32.mrf.mxu0
    %1002 = vdwg.mxu0
    %v1003 = vadd.f32 %v982, %v1000
    %v1004 = vxor.u32 %v1003, 2147483648
    %v1005 = vmul.f32 %v1004, 1.442695
    %v1006 = vpow.pop %v1005
    %v1007 = vadd.f32 %v1006, 1.0
    %v1008 = vrcp.pop %v1007
    %v1009 = vmul.f32 %v1007, %v1008
    %v1010 = vsub.f32 1.0, %v1009
    %v1011 = vmul.f32 %v1008, %v1010
    %v1012 = vadd.f32 %v1008, %v1011
    %vm1013 = vweird.f32 %v1007
    %vm1014 = vweird.f32 %v1008
    %vm1015 = vmor %vm1013, %vm1014
    %v1016 = vsel %vm1015, %v1008, %v1012
    %v1017 = vand.u32 2147483647, %v1007
    %vm1018 = vcmp.eq.f32.partialorder %v1017, 8.507059e+37
    %v1019 = vand.u32 %v1007, 2147483648
    %v1020 = vor.u32 1.1754944e-38, %v1019
    %v1021 = vsel %vm1018, %v1020, %v1016
    %v1022 = vmul.f32 1.0, %v1021
    %v1023 = vtanh.pop %v1003
    %v1024 = vmul.f32 %v1022, %v891
    %1026 = vrot.lane.b32.xlu0 %v1023, 32
    %v1027 = vpop.permute.xlu0 %1026
    %v1029 = vmul.f32 %v1022, %v1027
    %1031 = vrot.lane.b32.xlu0 %v1029, 32
    %v1032 = vpop.permute.xlu0 %1031
    %v1034 = vadd.f32 %v1024, %v1032
    %v1035 = vtanh.pop %v1034
    %1037 = vrot.lane.b32.xlu0 %v1035, 32
    %v1038 = vpop.permute.xlu0 %1037
    %v1040 = vmul.f32 %v1022, %v1038
    %1042 = vrot.lane.b32.xlu0 %v1040, 64
    %v1043 = vpop.permute.xlu0 %1042
    %1045 = vst.msk [vmem:[#allocation2 + $0x8] sm:$0xff] %vm71, %v1043
    %s1046 = sld [smem:[#allocation3 + $0x2]]
    %p1047 = scmp.eq.s32.totalorder %s1046, 1
    // Predicated region
    $region62: #{seq2seq_forward.1} parent=1 // pred_check
      %p1048 = pneg %p1047
    $region63: #{seq2seq_forward.1} parent=1 // pred_check_branch
      %1050 = sbr.rel (%p1048) target = $region65
    $region64: #{seq2seq_forward.1} parent=1 // pred_region
      _
    $region65: #{seq2seq_forward.1} parent=1 // pred_fallthru
      _
    %p1051 = pneg %p1047
    // Predicated region
    $region66: #{seq2seq_forward.1} parent=1 // pred_check
      _
    $region67: #{seq2seq_forward.1} parent=1 // pred_check_branch
      %1053 = sbr.rel (%p1047) target = $region69
    $region68: #{seq2seq_forward.1} parent=1 // pred_region
      %v1054 = vld [vmem:[%s10] sm:$0xff]
      %v1055 = vld [vmem:[%s10 + $0x8] sm:$0xff]
      %v1056 = vld [vmem:[%s10 + $0x10] sm:$0xff]
      %v1057 = vld [vmem:[%s10 + $0x18] sm:$0xff]
      %v1058 = vld [vmem:[%s11] sm:$0x1]
      %v1060 = vperm.slane %v1058, 0
      %v1062 = vsel %vm71, %v1043, 0
      %1064 = vmatpush.msra.mxu0 0.0
      %1065 = vmatpush.msra.mxu0 0.0
      %1066 = vmatpush.msra.mxu0 0.0
      %1067 = vmatpush.msra.mxu0 0.0
      %1068 = vmatpush.msra.mxu0 0.0
      %1069 = vmatpush.msra.mxu0 0.0
      %1070 = vmatpush.msra.mxu0 0.0
      %1071 = vmatpush.msra.mxu0 0.0
      %1072 = vmatpush.msra.mxu0 0.0
      %1073 = vmatpush.msra.mxu0 0.0
      %1074 = vmatpush.msra.mxu0 0.0
      %1075 = vmatpush.msra.mxu0 0.0
      %1076 = vmatpush.msra.mxu0 %v1057
      %1077 = vmatpush.msra.mxu0 %v1056
      %1078 = vmatpush.msra.mxu0 %v1055
      %1079 = vmatpush.msra.mxu0 %v1054
      %1080 = vmatmul.f32.gmra.mxu0 %v1062
      %v1081 = vpop.f32.mrf.mxu0
      %v1082 = vadd.f32 %v1060, %v1081
      %1083 = vdwg.mxu0
      %1084 = vmax.xlane.f32.xlu0 %v1082
      %v1085 = vpop.xlane.xlu0 %1084
      %vm1086 = vcmp.eq.f32.partialorder %v1082, %v1085
      %v1087 = vsel %vm1086, %v827, 128
      %v1088 = vand.u32 %v1087, 65535
      %v1089 = vshra.s32 %v1087, 16
      %v1090 = vcvt.s32.f32 %v1088
      %v1091 = vcvt.s32.f32 %v1089
      %1092 = vmin.xlane.f32.xlu0 %v1091
      %v1093 = vpop.xlane.xlu0 %1092
      %vm1094 = vcmp.eq.f32.partialorder %v1091, %v1093
      %v1095 = vsel %vm1094, %v1090, inf
      %1096 = vmin.xlane.f32.xlu0 %v1095
      %v1097 = vpop.xlane.xlu0 %1096
      %v1098 = vcvt.f32.s32 %v1097
      %v1099 = vcvt.f32.s32 %v1093
      %v1100 = vshll.u32 %v1099, 16
      %v1101 = vadd.s32 %v1100, %v1098
      %vm1102 = vcmp.eq.s32.totalorder %v827, %v1101
      %v1103 = vsel %vm1102, 1, 0
      %v1104 = vcvt.s32.f32 %v1103
      %1105 = vmatpush.msra.mxu0 %v820
      %1106 = vmatpush.msra.mxu0 %v817
      %1107 = vmatpush.msra.mxu0 %v814
      %1108 = vmatpush.msra.mxu0 %v811
      %1109 = vmatpush.msra.mxu0 %v808
      %1110 = vmatpush.msra.mxu0 %v805
      %1111 = vmatpush.msra.mxu0 %v802
      %1112 = vmatpush.msra.mxu0 %v799
      %1113 = vmatpush.msra.mxu0 %v796
      %1114 = vmatpush.msra.mxu0 %v793
      %1115 = vmatpush.msra.mxu0 %v790
      %1116 = vmatpush.msra.mxu0 %v787
      %1117 = vmatpush.msra.mxu0 %v784
      %1118 = vmatpush.msra.mxu0 %v781
      %1119 = vmatpush.msra.mxu0 %v778
      %1120 = vmatpush.msra.mxu0 %v775
      %1121 = vmatmul.f32.gmra.mxu0 %v1104
      %v1122 = vpop.f32.mrf.mxu0
      %v1123 = vadd.f32 0.0, %v1122
      %1124 = vdwg.mxu0
    $region69: #{seq2seq_forward.1} parent=1 // pred_fallthru
      %v1125 = vphi %v677, %v1123
    %v1126 = vpack.c.bf16 %v1040, %v1040
    %1128 = vrot.lane.b32.xlu0 %v1126, 64
    %v1129 = vpop.permute.xlu0 %1128
    %v1131 = vsel %vm71, %v1129, 0
    %1133 = vmatpush.bf16.msra.mxu0 0
    %1134 = vmatpush.bf16.msra.mxu0 0
    %1135 = vmatpush.bf16.msra.mxu0 0
    %1136 = vmatpush.bf16.msra.mxu0 0
    %1137 = vmatpush.bf16.msra.mxu0 0
    %1138 = vmatpush.bf16.msra.mxu0 0
    %1139 = vmatpush.bf16.msra.mxu0 %v841
    %1140 = vmatpush.bf16.msra.mxu0 %v840
    %1141 = vmatmul.bf16.gmra.mxu0 %v1131
    %v1142 = vpop.f32.mrf.mxu0
    %v1143 = vadd.f32 0.0, %v1142
    %v1144 = vpop.f32.mrf.mxu0
    %1145 = vdwg.mxu0
    %v1146 = vadd.f32 %v1125, %v1143
    %v1147 = vxor.u32 %v1146, 2147483648
    %v1148 = vmul.f32 %v1147, 1.442695
    %v1149 = vpow.pop %v1148
    %v1150 = vadd.f32 %v1149, 1.0
    %v1151 = vrcp.pop %v1150
    %v1152 = vmul.f32 %v1150, %v1151
    %v1153 = vsub.f32 1.0, %v1152
    %v1154 = vmul.f32 %v1151, %v1153
    %v1155 = vadd.f32 %v1151, %v1154
    %vm1156 = vweird.f32 %v1150
    %vm1157 = vweird.f32 %v1151
    %vm1158 = vmor %vm1156, %vm1157
    %v1159 = vsel %vm1158, %v1151, %v1155
    %v1160 = vand.u32 2147483647, %v1150
    %vm1161 = vcmp.eq.f32.partialorder %v1160, 8.507059e+37
    %v1162 = vand.u32 %v1150, 2147483648
    %v1163 = vor.u32 1.1754944e-38, %v1162
    %v1164 = vsel %vm1161, %v1163, %v1159
    %v1165 = vmul.f32 1.0, %v1164
    %v1166 = vtanh.pop %v1146
    %v1167 = vmul.f32 %v1165, %v1034
    %1169 = vrot.lane.b32.xlu0 %v1166, 32
    %v1170 = vpop.permute.xlu0 %1169
    %v1172 = vmul.f32 %v1165, %v1170
    %1174 = vrot.lane.b32.xlu0 %v1172, 32
    %v1175 = vpop.permute.xlu0 %1174
    %v1177 = vadd.f32 %v1167, %v1175
    %v1178 = vtanh.pop %v1177
    %1180 = vrot.lane.b32.xlu0 %v1178, 32
    %v1181 = vpop.permute.xlu0 %1180
    %v1183 = vmul.f32 %v1165, %v1181
    %1185 = vrot.lane.b32.xlu0 %v1183, 64
    %v1186 = vpop.permute.xlu0 %1185
    %1188 = vst.msk [vmem:[#allocation2 + $0x10] sm:$0xff] %vm71, %v1186
    %s1189 = sld [smem:[#allocation3 + $0x3]]
    %p1190 = scmp.eq.s32.totalorder %s1189, 1
    // Predicated region
    $region70: #{seq2seq_forward.1} parent=1 // pred_check
      %p1191 = pneg %p1190
    $region71: #{seq2seq_forward.1} parent=1 // pred_check_branch
      %1193 = sbr.rel (%p1191) target = $region73
    $region72: #{seq2seq_forward.1} parent=1 // pred_region
      _
    $region73: #{seq2seq_forward.1} parent=1 // pred_fallthru
      _
    %p1194 = pneg %p1190
    // Predicated region
    $region74: #{seq2seq_forward.1} parent=1 // pred_check
      _
    $region75: #{seq2seq_forward.1} parent=1 // pred_check_branch
      %1196 = sbr.rel (%p1190) target = $region77
    $region76: #{seq2seq_forward.1} parent=1 // pred_region
      %v1197 = vld [vmem:[%s10] sm:$0xff]
      %v1198 = vld [vmem:[%s10 + $0x8] sm:$0xff]
      %v1199 = vld [vmem:[%s10 + $0x10] sm:$0xff]
      %v1200 = vld [vmem:[%s10 + $0x18] sm:$0xff]
      %v1201 = vld [vmem:[%s11] sm:$0x1]
      %v1203 = vperm.slane %v1201, 0
      %v1205 = vsel %vm71, %v1186, 0
      %1207 = vmatpush.msra.mxu0 0.0
      %1208 = vmatpush.msra.mxu0 0.0
      %1209 = vmatpush.msra.mxu0 0.0
      %1210 = vmatpush.msra.mxu0 0.0
      %1211 = vmatpush.msra.mxu0 0.0
      %1212 = vmatpush.msra.mxu0 0.0
      %1213 = vmatpush.msra.mxu0 0.0
      %1214 = vmatpush.msra.mxu0 0.0
      %1215 = vmatpush.msra.mxu0 0.0
      %1216 = vmatpush.msra.mxu0 0.0
      %1217 = vmatpush.msra.mxu0 0.0
      %1218 = vmatpush.msra.mxu0 0.0
      %1219 = vmatpush.msra.mxu0 %v1200
      %1220 = vmatpush.msra.mxu0 %v1199
      %1221 = vmatpush.msra.mxu0 %v1198
      %1222 = vmatpush.msra.mxu0 %v1197
      %1223 = vmatmul.f32.gmra.mxu0 %v1205
      %v1224 = vpop.f32.mrf.mxu0
      %v1225 = vadd.f32 %v1203, %v1224
      %1226 = vdwg.mxu0
      %1227 = vmax.xlane.f32.xlu0 %v1225
      %v1228 = vpop.xlane.xlu0 %1227
      %vm1229 = vcmp.eq.f32.partialorder %v1225, %v1228
      %v1230 = vsel %vm1229, %v827, 128
      %v1231 = vand.u32 %v1230, 65535
      %v1232 = vshra.s32 %v1230, 16
      %v1233 = vcvt.s32.f32 %v1231
      %v1234 = vcvt.s32.f32 %v1232
      %1235 = vmin.xlane.f32.xlu0 %v1234
      %v1236 = vpop.xlane.xlu0 %1235
      %vm1237 = vcmp.eq.f32.partialorder %v1234, %v1236
      %v1238 = vsel %vm1237, %v1233, inf
      %1239 = vmin.xlane.f32.xlu0 %v1238
      %v1240 = vpop.xlane.xlu0 %1239
      %v1241 = vcvt.f32.s32 %v1240
      %v1242 = vcvt.f32.s32 %v1236
      %v1243 = vshll.u32 %v1242, 16
      %v1244 = vadd.s32 %v1243, %v1241
      %vm1245 = vcmp.eq.s32.totalorder %v827, %v1244
      %v1246 = vsel %vm1245, 1, 0
      %v1247 = vcvt.s32.f32 %v1246
      %1248 = vmatpush.msra.mxu0 %v820
      %1249 = vmatpush.msra.mxu0 %v817
      %1250 = vmatpush.msra.mxu0 %v814
      %1251 = vmatpush.msra.mxu0 %v811
      %1252 = vmatpush.msra.mxu0 %v808
      %1253 = vmatpush.msra.mxu0 %v805
      %1254 = vmatpush.msra.mxu0 %v802
      %1255 = vmatpush.msra.mxu0 %v799
      %1256 = vmatpush.msra.mxu0 %v796
      %1257 = vmatpush.msra.mxu0 %v793
      %1258 = vmatpush.msra.mxu0 %v790
      %1259 = vmatpush.msra.mxu0 %v787
      %1260 = vmatpush.msra.mxu0 %v784
      %1261 = vmatpush.msra.mxu0 %v781
      %1262 = vmatpush.msra.mxu0 %v778
      %1263 = vmatpush.msra.mxu0 %v775
      %1264 = vmatmul.f32.gmra.mxu0 %v1247
      %v1265 = vpop.f32.mrf.mxu0
      %v1266 = vadd.f32 0.0, %v1265
      %1267 = vdwg.mxu0
    $region77: #{seq2seq_forward.1} parent=1 // pred_fallthru
      %v1268 = vphi %v680, %v1266
    %v1269 = vpack.c.bf16 %v1183, %v1183
    %1271 = vrot.lane.b32.xlu0 %v1269, 64
    %v1272 = vpop.permute.xlu0 %1271
    %v1274 = vsel %vm71, %v1272, 0
    %1276 = vmatpush.bf16.msra.mxu0 0
    %1277 = vmatpush.bf16.msra.mxu0 0
    %1278 = vmatpush.bf16.msra.mxu0 0
    %1279 = vmatpush.bf16.msra.mxu0 0
    %1280 = vmatpush.bf16.msra.mxu0 0
    %1281 = vmatpush.bf16.msra.mxu0 0
    %1282 = vmatpush.bf16.msra.mxu0 %v841
    %1283 = vmatpush.bf16.msra.mxu0 %v840
    %1284 = vmatmul.bf16.gmra.mxu0 %v1274
    %v1285 = vpop.f32.mrf.mxu0
    %v1286 = vadd.f32 0.0, %v1285
    %v1287 = vpop.f32.mrf.mxu0
    %1288 = vdwg.mxu0
    %v1289 = vadd.f32 %v1268, %v1286
    %v1290 = vxor.u32 %v1289, 2147483648
    %v1291 = vmul.f32 %v1290, 1.442695
    %v1292 = vpow.pop %v1291
    %v1293 = vadd.f32 %v1292, 1.0
    %v1294 = vrcp.pop %v1293
    %v1295 = vmul.f32 %v1293, %v1294
    %v1296 = vsub.f32 1.0, %v1295
    %v1297 = vmul.f32 %v1294, %v1296
    %v1298 = vadd.f32 %v1294, %v1297
    %vm1299 = vweird.f32 %v1293
    %vm1300 = vweird.f32 %v1294
    %vm1301 = vmor %vm1299, %vm1300
    %v1302 = vsel %vm1301, %v1294, %v1298
    %v1303 = vand.u32 2147483647, %v1293
    %vm1304 = vcmp.eq.f32.partialorder %v1303, 8.507059e+37
    %v1305 = vand.u32 %v1293, 2147483648
    %v1306 = vor.u32 1.1754944e-38, %v1305
    %v1307 = vsel %vm1304, %v1306, %v1302
    %v1308 = vmul.f32 1.0, %v1307
    %v1309 = vtanh.pop %v1289
    %v1310 = vmul.f32 %v1308, %v1177
    %1312 = vrot.lane.b32.xlu0 %v1309, 32
    %v1313 = vpop.permute.xlu0 %1312
    %v1315 = vmul.f32 %v1308, %v1313
    %1317 = vrot.lane.b32.xlu0 %v1315, 32
    %v1318 = vpop.permute.xlu0 %1317
    %v1320 = vadd.f32 %v1310, %v1318
    %v1321 = vtanh.pop %v1320
    %1323 = vrot.lane.b32.xlu0 %v1321, 32
    %v1324 = vpop.permute.xlu0 %1323
    %v1326 = vmul.f32 %v1308, %v1324
    %1328 = vrot.lane.b32.xlu0 %v1326, 64
    %v1329 = vpop.permute.xlu0 %1328
    %1331 = vst.msk [vmem:[#allocation2 + $0x18] sm:$0xff] %vm71, %v1329
    %s1332 = sld [smem:[#allocation3 + $0x4]]
    %p1333 = scmp.eq.s32.totalorder %s1332, 1
    // Predicated region
    $region78: #{seq2seq_forward.1} parent=1 // pred_check
      %p1334 = pneg %p1333
    $region79: #{seq2seq_forward.1} parent=1 // pred_check_branch
      %1336 = sbr.rel (%p1334) target = $region81
    $region80: #{seq2seq_forward.1} parent=1 // pred_region
      _
    $region81: #{seq2seq_forward.1} parent=1 // pred_fallthru
      _
    %p1337 = pneg %p1333
    // Predicated region
    $region82: #{seq2seq_forward.1} parent=1 // pred_check
      _
    $region83: #{seq2seq_forward.1} parent=1 // pred_check_branch
      %1339 = sbr.rel (%p1333) target = $region85
    $region84: #{seq2seq_forward.1} parent=1 // pred_region
      %v1340 = vld [vmem:[%s10] sm:$0xff]
      %v1341 = vld [vmem:[%s10 + $0x8] sm:$0xff]
      %v1342 = vld [vmem:[%s10 + $0x10] sm:$0xff]
      %v1343 = vld [vmem:[%s10 + $0x18] sm:$0xff]
      %v1344 = vld [vmem:[%s11] sm:$0x1]
      %v1346 = vperm.slane %v1344, 0
      %v1348 = vsel %vm71, %v1329, 0
      %1350 = vmatpush.msra.mxu0 0.0
      %1351 = vmatpush.msra.mxu0 0.0
      %1352 = vmatpush.msra.mxu0 0.0
      %1353 = vmatpush.msra.mxu0 0.0
      %1354 = vmatpush.msra.mxu0 0.0
      %1355 = vmatpush.msra.mxu0 0.0
      %1356 = vmatpush.msra.mxu0 0.0
      %1357 = vmatpush.msra.mxu0 0.0
      %1358 = vmatpush.msra.mxu0 0.0
      %1359 = vmatpush.msra.mxu0 0.0
      %1360 = vmatpush.msra.mxu0 0.0
      %1361 = vmatpush.msra.mxu0 0.0
      %1362 = vmatpush.msra.mxu0 %v1343
      %1363 = vmatpush.msra.mxu0 %v1342
      %1364 = vmatpush.msra.mxu0 %v1341
      %1365 = vmatpush.msra.mxu0 %v1340
      %1366 = vmatmul.f32.gmra.mxu0 %v1348
      %v1367 = vpop.f32.mrf.mxu0
      %v1368 = vadd.f32 %v1346, %v1367
      %1369 = vdwg.mxu0
      %1370 = vmax.xlane.f32.xlu0 %v1368
      %v1371 = vpop.xlane.xlu0 %1370
      %vm1372 = vcmp.eq.f32.partialorder %v1368, %v1371
      %v1373 = vsel %vm1372, %v827, 128
      %v1374 = vand.u32 %v1373, 65535
      %v1375 = vshra.s32 %v1373, 16
      %v1376 = vcvt.s32.f32 %v1374
      %v1377 = vcvt.s32.f32 %v1375
      %1378 = vmin.xlane.f32.xlu0 %v1377
      %v1379 = vpop.xlane.xlu0 %1378
      %vm1380 = vcmp.eq.f32.partialorder %v1377, %v1379
      %v1381 = vsel %vm1380, %v1376, inf
      %1382 = vmin.xlane.f32.xlu0 %v1381
      %v1383 = vpop.xlane.xlu0 %1382
      %v1384 = vcvt.f32.s32 %v1383
      %v1385 = vcvt.f32.s32 %v1379
      %v1386 = vshll.u32 %v1385, 16
      %v1387 = vadd.s32 %v1386, %v1384
      %vm1388 = vcmp.eq.s32.totalorder %v827, %v1387
      %v1389 = vsel %vm1388, 1, 0
      %v1390 = vcvt.s32.f32 %v1389
      %1391 = vmatpush.msra.mxu0 %v820
      %1392 = vmatpush.msra.mxu0 %v817
      %1393 = vmatpush.msra.mxu0 %v814
      %1394 = vmatpush.msra.mxu0 %v811
      %1395 = vmatpush.msra.mxu0 %v808
      %1396 = vmatpush.msra.mxu0 %v805
      %1397 = vmatpush.msra.mxu0 %v802
      %1398 = vmatpush.msra.mxu0 %v799
      %1399 = vmatpush.msra.mxu0 %v796
      %1400 = vmatpush.msra.mxu0 %v793
      %1401 = vmatpush.msra.mxu0 %v790
      %1402 = vmatpush.msra.mxu0 %v787
      %1403 = vmatpush.msra.mxu0 %v784
      %1404 = vmatpush.msra.mxu0 %v781
      %1405 = vmatpush.msra.mxu0 %v778
      %1406 = vmatpush.msra.mxu0 %v775
      %1407 = vmatmul.f32.gmra.mxu0 %v1390
      %v1408 = vpop.f32.mrf.mxu0
      %v1409 = vadd.f32 0.0, %v1408
      %1410 = vdwg.mxu0
    $region85: #{seq2seq_forward.1} parent=1 // pred_fallthru
      %v1411 = vphi %v683, %v1409
    %v1412 = vpack.c.bf16 %v1326, %v1326
    %1414 = vrot.lane.b32.xlu0 %v1412, 64
    %v1415 = vpop.permute.xlu0 %1414
    %v1417 = vsel %vm71, %v1415, 0
    %1419 = vmatpush.bf16.msra.mxu0 0
    %1420 = vmatpush.bf16.msra.mxu0 0
    %1421 = vmatpush.bf16.msra.mxu0 0
    %1422 = vmatpush.bf16.msra.mxu0 0
    %1423 = vmatpush.bf16.msra.mxu0 0
    %1424 = vmatpush.bf16.msra.mxu0 0
    %1425 = vmatpush.bf16.msra.mxu0 %v841
    %1426 = vmatpush.bf16.msra.mxu0 %v840
    %1427 = vmatmul.bf16.gmra.mxu0 %v1417
    %v1428 = vpop.f32.mrf.mxu0
    %v1429 = vadd.f32 0.0, %v1428
    %v1430 = vpop.f32.mrf.mxu0
    %1431 = vdwg.mxu0
    %v1432 = vadd.f32 %v1411, %v1429
    %v1433 = vxor.u32 %v1432, 2147483648
    %v1434 = vmul.f32 %v1433, 1.442695
    %v1435 = vpow.pop %v1434
    %v1436 = vadd.f32 %v1435, 1.0
    %v1437 = vrcp.pop %v1436
    %v1438 = vmul.f32 %v1436, %v1437
    %v1439 = vsub.f32 1.0, %v1438
    %v1440 = vmul.f32 %v1437, %v1439
    %v1441 = vadd.f32 %v1437, %v1440
    %vm1442 = vweird.f32 %v1436
    %vm1443 = vweird.f32 %v1437
    %vm1444 = vmor %vm1442, %vm1443
    %v1445 = vsel %vm1444, %v1437, %v1441
    %v1446 = vand.u32 2147483647, %v1436
    %vm1447 = vcmp.eq.f32.partialorder %v1446, 8.507059e+37
    %v1448 = vand.u32 %v1436, 2147483648
    %v1449 = vor.u32 1.1754944e-38, %v1448
    %v1450 = vsel %vm1447, %v1449, %v1445
    %v1451 = vmul.f32 1.0, %v1450
    %v1452 = vtanh.pop %v1432
    %v1453 = vmul.f32 %v1451, %v1320
    %1455 = vrot.lane.b32.xlu0 %v1452, 32
    %v1456 = vpop.permute.xlu0 %1455
    %v1458 = vmul.f32 %v1451, %v1456
    %1460 = vrot.lane.b32.xlu0 %v1458, 32
    %v1461 = vpop.permute.xlu0 %1460
    %v1463 = vadd.f32 %v1453, %v1461
    %v1464 = vtanh.pop %v1463
    %1466 = vrot.lane.b32.xlu0 %v1464, 32
    %v1467 = vpop.permute.xlu0 %1466
    %v1469 = vmul.f32 %v1451, %v1467
    %1471 = vrot.lane.b32.xlu0 %v1469, 64
    %v1472 = vpop.permute.xlu0 %1471
    %1474 = vst.msk [vmem:[#allocation2 + $0x20] sm:$0xff] %vm71, %v1472
    %s1475 = sld [smem:[#allocation3 + $0x5]]
    %p1476 = scmp.eq.s32.totalorder %s1475, 1
    // Predicated region
    $region86: #{seq2seq_forward.1} parent=1 // pred_check
      %p1477 = pneg %p1476
    $region87: #{seq2seq_forward.1} parent=1 // pred_check_branch
      %1479 = sbr.rel (%p1477) target = $region89
    $region88: #{seq2seq_forward.1} parent=1 // pred_region
      _
    $region89: #{seq2seq_forward.1} parent=1 // pred_fallthru
      _
    %p1480 = pneg %p1476
    // Predicated region
    $region90: #{seq2seq_forward.1} parent=1 // pred_check
      _
    $region91: #{seq2seq_forward.1} parent=1 // pred_check_branch
      %1482 = sbr.rel (%p1476) target = $region93
    $region92: #{seq2seq_forward.1} parent=1 // pred_region
      %v1483 = vld [vmem:[%s10] sm:$0xff]
      %v1484 = vld [vmem:[%s10 + $0x8] sm:$0xff]
      %v1485 = vld [vmem:[%s10 + $0x10] sm:$0xff]
      %v1486 = vld [vmem:[%s10 + $0x18] sm:$0xff]
      %v1487 = vld [vmem:[%s11] sm:$0x1]
      %v1489 = vperm.slane %v1487, 0
      %v1491 = vsel %vm71, %v1472, 0
      %1493 = vmatpush.msra.mxu0 0.0
      %1494 = vmatpush.msra.mxu0 0.0
      %1495 = vmatpush.msra.mxu0 0.0
      %1496 = vmatpush.msra.mxu0 0.0
      %1497 = vmatpush.msra.mxu0 0.0
      %1498 = vmatpush.msra.mxu0 0.0
      %1499 = vmatpush.msra.mxu0 0.0
      %1500 = vmatpush.msra.mxu0 0.0
      %1501 = vmatpush.msra.mxu0 0.0
      %1502 = vmatpush.msra.mxu0 0.0
      %1503 = vmatpush.msra.mxu0 0.0
      %1504 = vmatpush.msra.mxu0 0.0
      %1505 = vmatpush.msra.mxu0 %v1486
      %1506 = vmatpush.msra.mxu0 %v1485
      %1507 = vmatpush.msra.mxu0 %v1484
      %1508 = vmatpush.msra.mxu0 %v1483
      %1509 = vmatmul.f32.gmra.mxu0 %v1491
      %v1510 = vpop.f32.mrf.mxu0
      %v1511 = vadd.f32 %v1489, %v1510
      %1512 = vdwg.mxu0
      %1513 = vmax.xlane.f32.xlu0 %v1511
      %v1514 = vpop.xlane.xlu0 %1513
      %vm1515 = vcmp.eq.f32.partialorder %v1511, %v1514
      %v1516 = vsel %vm1515, %v827, 128
      %v1517 = vand.u32 %v1516, 65535
      %v1518 = vshra.s32 %v1516, 16
      %v1519 = vcvt.s32.f32 %v1517
      %v1520 = vcvt.s32.f32 %v1518
      %1521 = vmin.xlane.f32.xlu0 %v1520
      %v1522 = vpop.xlane.xlu0 %1521
      %vm1523 = vcmp.eq.f32.partialorder %v1520, %v1522
      %v1524 = vsel %vm1523, %v1519, inf
      %1525 = vmin.xlane.f32.xlu0 %v1524
      %v1526 = vpop.xlane.xlu0 %1525
      %v1527 = vcvt.f32.s32 %v1526
      %v1528 = vcvt.f32.s32 %v1522
      %v1529 = vshll.u32 %v1528, 16
      %v1530 = vadd.s32 %v1529, %v1527
      %vm1531 = vcmp.eq.s32.totalorder %v827, %v1530
      %v1532 = vsel %vm1531, 1, 0
      %v1533 = vcvt.s32.f32 %v1532
      %1534 = vmatpush.msra.mxu0 %v820
      %1535 = vmatpush.msra.mxu0 %v817
      %1536 = vmatpush.msra.mxu0 %v814
      %1537 = vmatpush.msra.mxu0 %v811
      %1538 = vmatpush.msra.mxu0 %v808
      %1539 = vmatpush.msra.mxu0 %v805
      %1540 = vmatpush.msra.mxu0 %v802
      %1541 = vmatpush.msra.mxu0 %v799
      %1542 = vmatpush.msra.mxu0 %v796
      %1543 = vmatpush.msra.mxu0 %v793
      %1544 = vmatpush.msra.mxu0 %v790
      %1545 = vmatpush.msra.mxu0 %v787
      %1546 = vmatpush.msra.mxu0 %v784
      %1547 = vmatpush.msra.mxu0 %v781
      %1548 = vmatpush.msra.mxu0 %v778
      %1549 = vmatpush.msra.mxu0 %v775
      %1550 = vmatmul.f32.gmra.mxu0 %v1533
      %v1551 = vpop.f32.mrf.mxu0
      %v1552 = vadd.f32 0.0, %v1551
      %1553 = vdwg.mxu0
    $region93: #{seq2seq_forward.1} parent=1 // pred_fallthru
      %v1554 = vphi %v686, %v1552
    %v1555 = vpack.c.bf16 %v1469, %v1469
    %1557 = vrot.lane.b32.xlu0 %v1555, 64
    %v1558 = vpop.permute.xlu0 %1557
    %v1560 = vsel %vm71, %v1558, 0
    %1562 = vmatpush.bf16.msra.mxu0 0
    %1563 = vmatpush.bf16.msra.mxu0 0
    %1564 = vmatpush.bf16.msra.mxu0 0
    %1565 = vmatpush.bf16.msra.mxu0 0
    %1566 = vmatpush.bf16.msra.mxu0 0
    %1567 = vmatpush.bf16.msra.mxu0 0
    %1568 = vmatpush.bf16.msra.mxu0 %v841
    %1569 = vmatpush.bf16.msra.mxu0 %v840
    %1570 = vmatmul.bf16.gmra.mxu0 %v1560
    %v1571 = vpop.f32.mrf.mxu0
    %v1572 = vadd.f32 0.0, %v1571
    %v1573 = vpop.f32.mrf.mxu0
    %1574 = vdwg.mxu0
    %v1575 = vadd.f32 %v1554, %v1572
    %v1576 = vxor.u32 %v1575, 2147483648
    %v1577 = vmul.f32 %v1576, 1.442695
    %v1578 = vpow.pop %v1577
    %v1579 = vadd.f32 %v1578, 1.0
    %v1580 = vrcp.pop %v1579
    %v1581 = vmul.f32 %v1579, %v1580
    %v1582 = vsub.f32 1.0, %v1581
    %v1583 = vmul.f32 %v1580, %v1582
    %v1584 = vadd.f32 %v1580, %v1583
    %vm1585 = vweird.f32 %v1579
    %vm1586 = vweird.f32 %v1580
    %vm1587 = vmor %vm1585, %vm1586
    %v1588 = vsel %vm1587, %v1580, %v1584
    %v1589 = vand.u32 2147483647, %v1579
    %vm1590 = vcmp.eq.f32.partialorder %v1589, 8.507059e+37
    %v1591 = vand.u32 %v1579, 2147483648
    %v1592 = vor.u32 1.1754944e-38, %v1591
    %v1593 = vsel %vm1590, %v1592, %v1588
    %v1594 = vmul.f32 1.0, %v1593
    %v1595 = vtanh.pop %v1575
    %v1596 = vmul.f32 %v1594, %v1463
    %1598 = vrot.lane.b32.xlu0 %v1595, 32
    %v1599 = vpop.permute.xlu0 %1598
    %v1601 = vmul.f32 %v1594, %v1599
    %1603 = vrot.lane.b32.xlu0 %v1601, 32
    %v1604 = vpop.permute.xlu0 %1603
    %v1606 = vadd.f32 %v1596, %v1604
    %v1607 = vtanh.pop %v1606
    %1609 = vrot.lane.b32.xlu0 %v1607, 32
    %v1610 = vpop.permute.xlu0 %1609
    %v1612 = vmul.f32 %v1594, %v1610
    %1614 = vrot.lane.b32.xlu0 %v1612, 64
    %v1615 = vpop.permute.xlu0 %1614
    %1617 = vst.msk [vmem:[#allocation2 + $0x28] sm:$0xff] %vm71, %v1615
    %s1618 = sld [smem:[#allocation3 + $0x6]]
    %p1619 = scmp.eq.s32.totalorder %s1618, 1
    // Predicated region
    $region94: #{seq2seq_forward.1} parent=1 // pred_check
      %p1620 = pneg %p1619
    $region95: #{seq2seq_forward.1} parent=1 // pred_check_branch
      %1622 = sbr.rel (%p1620) target = $region97
    $region96: #{seq2seq_forward.1} parent=1 // pred_region
      _
    $region97: #{seq2seq_forward.1} parent=1 // pred_fallthru
      _
    %p1623 = pneg %p1619
    // Predicated region
    $region98: #{seq2seq_forward.1} parent=1 // pred_check
      _
    $region99: #{seq2seq_forward.1} parent=1 // pred_check_branch
      %1625 = sbr.rel (%p1619) target = $region101
    $region100: #{seq2seq_forward.1} parent=1 // pred_region
      %v1626 = vld [vmem:[%s10] sm:$0xff]
      %v1627 = vld [vmem:[%s10 + $0x8] sm:$0xff]
      %v1628 = vld [vmem:[%s10 + $0x10] sm:$0xff]
      %v1629 = vld [vmem:[%s10 + $0x18] sm:$0xff]
      %v1630 = vld [vmem:[%s11] sm:$0x1]
      %v1632 = vperm.slane %v1630, 0
      %v1634 = vsel %vm71, %v1615, 0
      %1636 = vmatpush.msra.mxu0 0.0
      %1637 = vmatpush.msra.mxu0 0.0
      %1638 = vmatpush.msra.mxu0 0.0
      %1639 = vmatpush.msra.mxu0 0.0
      %1640 = vmatpush.msra.mxu0 0.0
      %1641 = vmatpush.msra.mxu0 0.0
      %1642 = vmatpush.msra.mxu0 0.0
      %1643 = vmatpush.msra.mxu0 0.0
      %1644 = vmatpush.msra.mxu0 0.0
      %1645 = vmatpush.msra.mxu0 0.0
      %1646 = vmatpush.msra.mxu0 0.0
      %1647 = vmatpush.msra.mxu0 0.0
      %1648 = vmatpush.msra.mxu0 %v1629
      %1649 = vmatpush.msra.mxu0 %v1628
      %1650 = vmatpush.msra.mxu0 %v1627
      %1651 = vmatpush.msra.mxu0 %v1626
      %1652 = vmatmul.f32.gmra.mxu0 %v1634
      %v1653 = vpop.f32.mrf.mxu0
      %v1654 = vadd.f32 %v1632, %v1653
      %1655 = vdwg.mxu0
      %1656 = vmax.xlane.f32.xlu0 %v1654
      %v1657 = vpop.xlane.xlu0 %1656
      %vm1658 = vcmp.eq.f32.partialorder %v1654, %v1657
      %v1659 = vsel %vm1658, %v827, 128
      %v1660 = vand.u32 %v1659, 65535
      %v1661 = vshra.s32 %v1659, 16
      %v1662 = vcvt.s32.f32 %v1660
      %v1663 = vcvt.s32.f32 %v1661
      %1664 = vmin.xlane.f32.xlu0 %v1663
      %v1665 = vpop.xlane.xlu0 %1664
      %vm1666 = vcmp.eq.f32.partialorder %v1663, %v1665
      %v1667 = vsel %vm1666, %v1662, inf
      %1668 = vmin.xlane.f32.xlu0 %v1667
      %v1669 = vpop.xlane.xlu0 %1668
      %v1670 = vcvt.f32.s32 %v1669
      %v1671 = vcvt.f32.s32 %v1665
      %v1672 = vshll.u32 %v1671, 16
      %v1673 = vadd.s32 %v1672, %v1670
      %vm1674 = vcmp.eq.s32.totalorder %v827, %v1673
      %v1675 = vsel %vm1674, 1, 0
      %v1676 = vcvt.s32.f32 %v1675
      %1677 = vmatpush.msra.mxu0 %v820
      %1678 = vmatpush.msra.mxu0 %v817
      %1679 = vmatpush.msra.mxu0 %v814
      %1680 = vmatpush.msra.mxu0 %v811
      %1681 = vmatpush.msra.mxu0 %v808
      %1682 = vmatpush.msra.mxu0 %v805
      %1683 = vmatpush.msra.mxu0 %v802
      %1684 = vmatpush.msra.mxu0 %v799
      %1685 = vmatpush.msra.mxu0 %v796
      %1686 = vmatpush.msra.mxu0 %v793
      %1687 = vmatpush.msra.mxu0 %v790
      %1688 = vmatpush.msra.mxu0 %v787
      %1689 = vmatpush.msra.mxu0 %v784
      %1690 = vmatpush.msra.mxu0 %v781
      %1691 = vmatpush.msra.mxu0 %v778
      %1692 = vmatpush.msra.mxu0 %v775
      %1693 = vmatmul.f32.gmra.mxu0 %v1676
      %v1694 = vpop.f32.mrf.mxu0
      %v1695 = vadd.f32 0.0, %v1694
      %1696 = vdwg.mxu0
    $region101: #{seq2seq_forward.1} parent=1 // pred_fallthru
      %v1697 = vphi %v689, %v1695
    %v1698 = vpack.c.bf16 %v1612, %v1612
    %1700 = vrot.lane.b32.xlu0 %v1698, 64
    %v1701 = vpop.permute.xlu0 %1700
    %v1703 = vsel %vm71, %v1701, 0
    %1705 = vmatpush.bf16.msra.mxu0 0
    %1706 = vmatpush.bf16.msra.mxu0 0
    %1707 = vmatpush.bf16.msra.mxu0 0
    %1708 = vmatpush.bf16.msra.mxu0 0
    %1709 = vmatpush.bf16.msra.mxu0 0
    %1710 = vmatpush.bf16.msra.mxu0 0
    %1711 = vmatpush.bf16.msra.mxu0 %v841
    %1712 = vmatpush.bf16.msra.mxu0 %v840
    %1713 = vmatmul.bf16.gmra.mxu0 %v1703
    %v1714 = vpop.f32.mrf.mxu0
    %v1715 = vadd.f32 0.0, %v1714
    %v1716 = vpop.f32.mrf.mxu0
    %1717 = vdwg.mxu0
    %v1718 = vadd.f32 %v1697, %v1715
    %v1719 = vxor.u32 %v1718, 2147483648
    %v1720 = vmul.f32 %v1719, 1.442695
    %v1721 = vpow.pop %v1720
    %v1722 = vadd.f32 %v1721, 1.0
    %v1723 = vrcp.pop %v1722
    %v1724 = vmul.f32 %v1722, %v1723
    %v1725 = vsub.f32 1.0, %v1724
    %v1726 = vmul.f32 %v1723, %v1725
    %v1727 = vadd.f32 %v1723, %v1726
    %vm1728 = vweird.f32 %v1722
    %vm1729 = vweird.f32 %v1723
    %vm1730 = vmor %vm1728, %vm1729
    %v1731 = vsel %vm1730, %v1723, %v1727
    %v1732 = vand.u32 2147483647, %v1722
    %vm1733 = vcmp.eq.f32.partialorder %v1732, 8.507059e+37
    %v1734 = vand.u32 %v1722, 2147483648
    %v1735 = vor.u32 1.1754944e-38, %v1734
    %v1736 = vsel %vm1733, %v1735, %v1731
    %v1737 = vmul.f32 1.0, %v1736
    %v1738 = vtanh.pop %v1718
    %v1739 = vmul.f32 %v1737, %v1606
    %1741 = vrot.lane.b32.xlu0 %v1738, 32
    %v1742 = vpop.permute.xlu0 %1741
    %v1744 = vmul.f32 %v1737, %v1742
    %1746 = vrot.lane.b32.xlu0 %v1744, 32
    %v1747 = vpop.permute.xlu0 %1746
    %v1749 = vadd.f32 %v1739, %v1747
    %v1750 = vtanh.pop %v1749
    %1752 = vrot.lane.b32.xlu0 %v1750, 32
    %v1753 = vpop.permute.xlu0 %1752
    %v1755 = vmul.f32 %v1737, %v1753
    %1757 = vrot.lane.b32.xlu0 %v1755, 64
    %v1758 = vpop.permute.xlu0 %1757
    %1760 = vst.msk [vmem:[#allocation2 + $0x30] sm:$0xff] %vm71, %v1758
    %v1761 = vld [vmem:[#allocation2] sm:$0xff]
    %v1762 = vld [vmem:[#allocation2 + $0x8] sm:$0xff]
    %v1763 = vld [vmem:[#allocation2 + $0x10] sm:$0xff]
    %v1764 = vld [vmem:[#allocation2 + $0x18] sm:$0xff]
    %v1765 = vld [vmem:[#allocation2 + $0x20] sm:$0xff]
    %v1766 = vld [vmem:[#allocation2 + $0x28] sm:$0xff]
    %v1767 = vld [vmem:[#allocation2 + $0x30] sm:$0xff]
    %v1768 = vld [vmem:[%s10] sm:$0xff]
    %v1769 = vld [vmem:[%s10 + $0x8] sm:$0xff]
    %v1770 = vld [vmem:[%s10 + $0x10] sm:$0xff]
    %v1771 = vld [vmem:[%s10 + $0x18] sm:$0xff]
    %v1772 = vld [vmem:[%s11] sm:$0x1]
    %v1774 = vperm.slane %v1772, 0
    %v1777 = vsel %vm71, %v1761, 0
    %v1780 = vsel %vm71, %v1762, 0
    %v1783 = vsel %vm71, %v1763, 0
    %v1786 = vsel %vm71, %v1764, 0
    %v1789 = vsel %vm71, %v1765, 0
    %v1792 = vsel %vm71, %v1766, 0
    %v1795 = vsel %vm71, %v1767, 0
    %1797 = vmatpush.msra.mxu0 0.0
    %1798 = vmatpush.msra.mxu0 0.0
    %1799 = vmatpush.msra.mxu0 0.0
    %1800 = vmatpush.msra.mxu0 0.0
    %1801 = vmatpush.msra.mxu0 0.0
    %1802 = vmatpush.msra.mxu0 0.0
    %1803 = vmatpush.msra.mxu0 0.0
    %1804 = vmatpush.msra.mxu0 0.0
    %1805 = vmatpush.msra.mxu0 0.0
    %1806 = vmatpush.msra.mxu0 0.0
    %1807 = vmatpush.msra.mxu0 0.0
    %1808 = vmatpush.msra.mxu0 0.0
    %1809 = vmatpush.msra.mxu0 %v1771
    %1810 = vmatpush.msra.mxu0 %v1770
    %1811 = vmatpush.msra.mxu0 %v1769
    %1812 = vmatpush.msra.mxu0 %v1768
    %1813 = vmatmul.f32.gmra.mxu0 %v1777
    %v1814 = vpop.f32.mrf.mxu0
    %v1815 = vadd.f32 %v1774, %v1814
    %1816 = vmatmul.f32.gmra.mxu0 %v1780
    %v1817 = vpop.f32.mrf.mxu0
    %v1818 = vadd.f32 %v1774, %v1817
    %1819 = vmatmul.f32.gmra.mxu0 %v1783
    %v1820 = vpop.f32.mrf.mxu0
    %v1821 = vadd.f32 %v1774, %v1820
    %1822 = vmatmul.f32.gmra.mxu0 %v1786
    %v1823 = vpop.f32.mrf.mxu0
    %v1824 = vadd.f32 %v1774, %v1823
    %1825 = vmatmul.f32.gmra.mxu0 %v1789
    %v1826 = vpop.f32.mrf.mxu0
    %v1827 = vadd.f32 %v1774, %v1826
    %1828 = vmatmul.f32.gmra.mxu0 %v1792
    %v1829 = vpop.f32.mrf.mxu0
    %v1830 = vadd.f32 %v1774, %v1829
    %1831 = vmatmul.f32.gmra.mxu0 %v1795
    %v1832 = vpop.f32.mrf.mxu0
    %v1833 = vadd.f32 %v1774, %v1832
    %1834 = vdwg.mxu0
    %1835 = vst [vmem:[%s12] sm:$0xff] 0.0
    %s1836 = scalar_lea.vmem %s12, 8
    %1837 = vst [vmem:[%s1836] sm:$0xff] %v1815
    %1838 = vst [vmem:[%s1836 + $0x8] sm:$0xff] %v1818
    %1839 = vst [vmem:[%s1836 + $0x10] sm:$0xff] %v1821
    %1840 = vst [vmem:[%s1836 + $0x18] sm:$0xff] %v1824
    %1841 = vst [vmem:[%s1836 + $0x20] sm:$0xff] %v1827
    %1842 = vst [vmem:[%s1836 + $0x28] sm:$0xff] %v1830
    %1843 = vst [vmem:[%s1836 + $0x30] sm:$0xff] %v1833
    // Predicated region
    $region102: #{seq2seq_forward.1} parent=1 // pred_check
      _
    $region103: #{seq2seq_forward.1} parent=1 // pred_check_branch
      %1845 = sbr.rel (0) target = $region105
    $region104: #{seq2seq_forward.1} parent=1 // pred_region
      _
    $region105: #{seq2seq_forward.1} parent=1 // pred_fallthru
      _
    // Predicated region
    $region106: #{seq2seq_forward.1} parent=1 // pred_check
      _
    $region107: #{seq2seq_forward.1} parent=1 // pred_check_branch
      %1847 = sbr.rel (0) target = $region109
    $region108: #{seq2seq_forward.1} parent=1 // pred_region
      _
    $region109: #{seq2seq_forward.1} parent=1 // pred_fallthru
      _
    %1848 = vsyncpa [#allocation4], 1

</llo_original>
